<compile_context>
chip_gen: v7x
topology: tpu7x:2x2x1
jax: 0.10.0
libtpu: 0.0.40
codegen_flags: <defaults>
</compile_context>

<pallas_src>
import jax
import jax.numpy as jnp
from jax.experimental import pallas as pl
from jax.experimental.pallas import tpu as pltpu


def _encoder_head_kernel(x_ref, w_ref, b_ref, o_ref):
    """Fused avg_pool2d(kernel=7) + flatten + Linear for one batch tile.

    x_ref: [TB, C, HW]  backbone feature-map tile (HW = 7*7 = 49), bf16/f32
    w_ref: [C, E]       embed weight, transposed AND pre-scaled by 1/HW
    b_ref: [1, E]       embed bias (f32)
    o_ref: [TB, E]      output embedding (f32)
    """
    # Spatial pooling: sum over the last (lane) axis in f32. The 1/HW average
    # factor is already folded into w, so a plain sum suffices (no per-block
    # TB*C VPU multiply).
    pooled = jnp.sum(x_ref[...].astype(jnp.float32), axis=-1)        # [TB, C]
    # Linear: cast the LHS to the weight dtype (bf16) so the MXU runs a native
    # bf16 pass; accumulate in f32.
    out = jnp.dot(pooled.astype(w_ref.dtype), w_ref[...],
                  preferred_element_type=jnp.float32)                # [TB, E]
    o_ref[...] = (out + b_ref[...].astype(jnp.float32)).astype(o_ref.dtype)


def encoder_cnn_head(features_nchw, embed_weight, embed_bias, *, batch_tile=8):
    """Pallas implementation of EncoderCNN post-backbone forward.

    features_nchw: [B, C, H, W]  (H = W = 7, as produced by densenet161 features)
    embed_weight:  [E, C]        (PyTorch nn.Linear.weight layout)
    embed_bias:    [E]
    returns:       [B, E] float32
    """
    B, C, H, W = features_nchw.shape
    E = embed_weight.shape[0]
    HW = H * W

    # Free reshape of the contiguous NCHW tensor — NO transpose, no extra HBM
    # pass over the largest tensor. The kernel reduces over the last axis.
    x = features_nchw.reshape(B, C, HW)

    # Fold avg-pool's 1/HW into the (transposed) weight. This is a tiny [C, E]
    # tensor, constant-folded by XLA; keeps the weight in the activation dtype
    # (bf16) so the matmul is a native bf16 MXU pass.
    w = (embed_weight.astype(jnp.float32).T / float(HW)).astype(features_nchw.dtype)
    b = embed_bias.astype(jnp.float32).reshape(1, E)

    tb = max(1, min(batch_tile, B))
    grid = (pl.cdiv(B, tb),)

    # NOTE: for real densenet shapes (C=2208, large B) keep TB modest on v7x
    # (64 MiB VMEM) and/or raise vmem_limit_bytes via pltpu.CompilerParams on
    # v5e/v6e if the double-buffered x block exceeds the scoped default.
    return pl.pallas_call(
        _encoder_head_kernel,
        out_shape=jax.ShapeDtypeStruct((B, E), jnp.float32),
        grid=grid,
        in_specs=[
            # Batch-tiled feature map: double-buffered across the grid.
            pl.BlockSpec((tb, C, HW), lambda i: (i, 0, 0)),
            # Weight / bias: constant index_map -> stay VMEM-resident.
            pl.BlockSpec((C, E), lambda i: (0, 0)),
            pl.BlockSpec((1, E), lambda i: (0, 0)),
        ],
        out_specs=pl.BlockSpec((tb, E), lambda i: (i, 0)),
        compiler_params=pltpu.CompilerParams(
            # Batch tiles are independent: shard them across the two
            # TensorCores on v7x (no-op on single-TC v5e/v6e).
            dimension_semantics=("parallel",)),
    )(x, w, b)


if __name__ == "__main__":
    # Small, deterministic synthetic shapes consistent with the module:
    #   backbone feature map : [B=16, C=128, 7, 7] (C stands in for densenet's 2208)
    #   embed_size           : 32
    key = jax.random.PRNGKey(0)
    k_feat, k_w, k_b = jax.random.split(key, 3)

    B, C, H, W = 16, 128, 7, 7
    embed_size = 32

    # Backbone activations/weights are bf16 on TPU (halves dominant HBM traffic).
    features = jax.random.normal(
        k_feat, (B, C, H, W), dtype=jnp.float32).astype(jnp.bfloat16)
    embed_weight = (jax.random.normal(
        k_w, (embed_size, C), dtype=jnp.float32) * 0.02).astype(jnp.bfloat16)
    embed_bias = jax.random.normal(k_b, (embed_size,), dtype=jnp.float32) * 0.02

    out = encoder_cnn_head(features, embed_weight, embed_bias, batch_tile=8)
    out = jax.block_until_ready(out)

    # Plain-JAX f32 reference of the same forward (avg_pool2d(k=7) + flatten +
    # Linear), using the same bf16-valued parameters promoted to f32.
    feat_f32 = features.astype(jnp.float32)
    pooled_ref = jnp.mean(feat_f32, axis=(2, 3))                       # [B, C]
    ref = pooled_ref @ embed_weight.astype(jnp.float32).T + embed_bias  # [B, E]

    assert out.shape == (B, embed_size), out.shape
    max_err = float(jnp.max(jnp.abs(out - ref)))
    assert jnp.allclose(out, ref, atol=1e-2, rtol=2e-2), f"mismatch: {max_err}"

    print("KERNEL_OK")
</pallas_src>

<mosaic_0001>
module attributes {stable_mosaic.version = 11 : i64} {
  func.func @_encoder_head_kernel(%arg0: i32, %arg1: memref<8x128x49xbf16, #tpu.memory_space<vmem>>, %arg2: memref<128x32xbf16, #tpu.memory_space<vmem>>, %arg3: memref<1x32xf32, #tpu.memory_space<vmem>>, %arg4: memref<8x32xf32, #tpu.memory_space<vmem>>) attributes {dimension_semantics = [#tpu.dimension_semantics<parallel>], iteration_bounds = array<i64: 2>, scalar_prefetch = 0 : i64, scratch_operands = 0 : i64, tpu.core_type = #tpu.core_type<tc>, window_params = [{transform_indices = @transform_0, window_bounds = array<i64: 8, 128, 49>}, {pipeline_mode = #tpu.pipeline_mode<synchronous>, transform_indices = @transform_1, window_bounds = array<i64: 128, 32>}, {pipeline_mode = #tpu.pipeline_mode<synchronous>, transform_indices = @transform_2, window_bounds = array<i64: 1, 32>}, {transform_indices = @transform_3, window_bounds = array<i64: 8, 32>}]} {
    %c0 = arith.constant 0 : index
    %c0_0 = arith.constant 0 : index
    %c0_1 = arith.constant 0 : index
    %0 = vector.load %arg1[%c0, %c0_0, %c0_1] : memref<8x128x49xbf16, #tpu.memory_space<vmem>>, vector<8x128x49xbf16>
    %1 = arith.extf %0 : vector<8x128x49xbf16> to vector<8x128x49xf32>
    %cst = arith.constant dense<0.000000e+00> : vector<8x128xf32>
    %2 = vector.multi_reduction <add>, %1, %cst [2] : vector<8x128x49xf32> to vector<8x128xf32>
    %3 = arith.truncf %2 : vector<8x128xf32> to vector<8x128xbf16>
    %c0_2 = arith.constant 0 : index
    %c0_3 = arith.constant 0 : index
    %4 = vector.load %arg2[%c0_2, %c0_3] : memref<128x32xbf16, #tpu.memory_space<vmem>>, vector<128x32xbf16>
    %cst_4 = arith.constant dense<0.000000e+00> : vector<8x32xf32>
    %5 = tpu.matmul %3, %4, %cst_4 {dimension_numbers = #tpu.dot_dimension_numbers<[1], [0], [0], [1], [0, 0, 1, 1], [], []>} : vector<8x128xbf16>, vector<128x32xbf16>, vector<8x32xf32> -> vector<8x32xf32>
    %c0_5 = arith.constant 0 : index
    %c0_6 = arith.constant 0 : index
    %6 = vector.load %arg3[%c0_5, %c0_6] : memref<1x32xf32, #tpu.memory_space<vmem>>, vector<1x32xf32>
    %7 = vector.broadcast %6 : vector<1x32xf32> to vector<8x32xf32>
    %8 = arith.addf %5, %7 : vector<8x32xf32>
    %c0_7 = arith.constant 0 : index
    %c0_8 = arith.constant 0 : index
    %9 = vector.load %arg4[%c0_7, %c0_8] : memref<8x32xf32, #tpu.memory_space<vmem>>, vector<8x32xf32>
    tpu.vector_store %arg4[%c0_7, %c0_8], %8 {strides = array<i32>} : memref<8x32xf32, #tpu.memory_space<vmem>>, vector<8x32xf32>,
    return
  }
  func.func @transform_0(%arg0: i32) -> (i32, i32, i32) {
    %c0_i32 = arith.constant 0 : i32
    %c0_i32_0 = arith.constant 0 : i32
    %c0_i32_1 = arith.constant 0 : i32
    return %arg0, %c0_i32, %c0_i32_0 : i32, i32, i32
  }
  func.func @transform_1(%arg0: i32) -> (i32, i32) {
    %c0_i32 = arith.constant 0 : i32
    %c0_i32_0 = arith.constant 0 : i32
    %c0_i32_1 = arith.constant 0 : i32
    return %c0_i32, %c0_i32_0 : i32, i32
  }
  func.func @transform_2(%arg0: i32) -> (i32, i32) {
    %c0_i32 = arith.constant 0 : i32
    %c0_i32_0 = arith.constant 0 : i32
    %c0_i32_1 = arith.constant 0 : i32
    return %c0_i32, %c0_i32_0 : i32, i32
  }
  func.func @transform_3(%arg0: i32) -> (i32, i32) {
    %c0_i32 = arith.constant 0 : i32
    %c0_i32_0 = arith.constant 0 : i32
    return %arg0, %c0_i32 : i32, i32
  }
}

</mosaic_0001>

<llo_original>
// kernel: tpu_custom_call.1
$region0: #{tpu_custom_call.1}
  #allocation0 [shape = 'u32[]', space=smem, size = 0x4, offset = 0x4, fixed_abs, tag = 'smem constant byte address 0x4 - core index']
  #allocation1 [shape = 'u32[144,128]{1,0:T(1,128)}', space=vmem, size = 0x12000, scoped, tag = 'internal scratch']
  %s0 = inlined_call_operand.vmem [shape: bf16[16,128,49], index: 0, kind: input, shape index: {}]
  %s1 = inlined_call_operand.vmem [shape: bf16[128,32], index: 1, kind: input, shape index: {}]
  %s2 = inlined_call_operand.vmem [shape: f32[1,32], index: 2, kind: input, shape index: {}]
  %s3 = inlined_call_operand.hbm [shape: f32[16,32], index: 3, kind: output, shape index: {}]
  %s4 = sld [smem:[#allocation0]]
  $region45: #{tpu_custom_call.1} parent=0
    _
  %s6 = ssub.s32 1, %s4
  %s7 = scalar_select 0, %s6, %s4
  $region1: #{tpu_custom_call.1} parent=0
    #allocation2 [shape = 'u8[8192]{0}', space=vmem, size = 0x2000, scoped, tag = 'output window, operand 0']
    #allocation3 [shape = 's32[2]{0}', space=sflag, size = 0x8, scoped, tag = 'scoped memory for tpu_custom_call.1']
    %8 = vsyncpa [#allocation3], 0
    %s9 = scalar_lea.sflag [#allocation3], 1
    %10 = vsyncpa %s9, 0
    loop: start=0, step=1, limit=4
    $region2: #{tpu_custom_call.1} parent=1 // loop_pre_header
      _
    $region3: #{tpu_custom_call.1} parent=1 // loop_header
      %s12 = sphi 0, %s16
      %p13 = scmp.ge.s32.totalorder %s12, 4
      %s22 = sphi 0, %s24
      %s25 = sphi 0, %s22
      %s26 = sphi 0, %s25
      %s42 = sphi 0, %s26
      %s46 = sphi 0, %s46
      %s48 = sphi 0, %s46
      %s49 = sphi 0, %s48
      %s63 = sphi 0, %s49
      %s67 = sphi 0, %s67
      %s69 = sphi 0, %s67
      %s70 = sphi 0, %s69
      %s84 = sphi 0, %s70
      %s90 = sphi 0, %s92
      %s93 = sphi 0, %s90
      %s94 = sphi 0, %s93
      %s110 = sphi 0, %s94
    $region4: #{tpu_custom_call.1} parent=1 // loop_header_branch
      %15 = sbr.rel (%p13) target = $region8
    $region5: #{tpu_custom_call.1} parent=1 // loop_body
      %s17 = ssub.s32 %s12, 1
      %s18 = ssub.s32 %s12, 2
      %s19 = sadd.s32 %s12, 1
      %s20 = ssub.s32 %s12, %s19
      %p21 = scmp.eq.s32.totalorder %s20, 0
      %s23 = sadd.s32 %s22, 1
      %s24 = scalar_select %p21, %s22, %s23
      %p27 = pneg %p21
      %p28 = scmp.eq.s32.totalorder %s12, 1
      %p29 = por %p27, %p28
      %p30 = scmp.ne.s32.totalorder %s22, %s25
      %p31 = scmp.eq.s32.totalorder %s12, 0
      %p32 = por %p30, %p31
      %p33 = scmp.ne.s32.totalorder %s22, %s25
      %p34 = scmp.eq.s32.totalorder %s17, 1
      %p35 = por %p33, %p34
      %p36 = scmp.ne.s32.totalorder %s25, %s26
      %p37 = scmp.eq.s32.totalorder %s17, 0
      %p38 = por %p36, %p37
      %p39 = scmp.ne.s32.totalorder %s25, %s26
      %p40 = scmp.eq.s32.totalorder %s18, 1
      %p41 = por %p39, %p40
      %p43 = scmp.ne.s32.totalorder %s26, %s42
      %p44 = scmp.eq.s32.totalorder %s18, 0
      %p45 = por %p43, %p44
      %s47 = sadd.s32 %s46, 1
      %p50 = scmp.eq.s32.totalorder %s12, 1
      %p51 = scmp.ne.s32.totalorder %s46, %s48
      %p52 = scmp.eq.s32.totalorder %s12, 0
      %p53 = por %p51, %p52
      %p54 = scmp.ne.s32.totalorder %s46, %s48
      %p55 = scmp.eq.s32.totalorder %s17, 1
      %p56 = por %p54, %p55
      %p57 = scmp.ne.s32.totalorder %s48, %s49
      %p58 = scmp.eq.s32.totalorder %s17, 0
      %p59 = por %p57, %p58
      %p60 = scmp.ne.s32.totalorder %s48, %s49
      %p61 = scmp.eq.s32.totalorder %s18, 1
      %p62 = por %p60, %p61
      %p64 = scmp.ne.s32.totalorder %s49, %s63
      %p65 = scmp.eq.s32.totalorder %s18, 0
      %p66 = por %p64, %p65
      %s68 = sadd.s32 %s67, 1
      %p71 = scmp.eq.s32.totalorder %s12, 1
      %p72 = scmp.ne.s32.totalorder %s67, %s69
      %p73 = scmp.eq.s32.totalorder %s12, 0
      %p74 = por %p72, %p73
      %p75 = scmp.ne.s32.totalorder %s67, %s69
      %p76 = scmp.eq.s32.totalorder %s17, 1
      %p77 = por %p75, %p76
      %p78 = scmp.ne.s32.totalorder %s69, %s70
      %p79 = scmp.eq.s32.totalorder %s17, 0
      %p80 = por %p78, %p79
      %p81 = scmp.ne.s32.totalorder %s69, %s70
      %p82 = scmp.eq.s32.totalorder %s18, 1
      %p83 = por %p81, %p82
      %p85 = scmp.ne.s32.totalorder %s70, %s84
      %p86 = scmp.eq.s32.totalorder %s18, 0
      %p87 = por %p85, %p86
      %s88 = ssub.s32 %s12, %s19
      %p89 = scmp.eq.s32.totalorder %s88, 0
      %s91 = sadd.s32 %s90, 1
      %s92 = scalar_select %p89, %s90, %s91
      %p95 = pneg %p89
      %p96 = scmp.eq.s32.totalorder %s12, 1
      %p97 = por %p95, %p96
      %p98 = scmp.ne.s32.totalorder %s90, %s93
      %p99 = scmp.eq.s32.totalorder %s12, 0
      %p100 = por %p98, %p99
      %p101 = scmp.ne.s32.totalorder %s90, %s93
      %p102 = scmp.eq.s32.totalorder %s17, 1
      %p103 = por %p101, %p102
      %p104 = scmp.ne.s32.totalorder %s93, %s94
      %p105 = scmp.eq.s32.totalorder %s17, 0
      %p106 = por %p104, %p105
      %p107 = scmp.ne.s32.totalorder %s93, %s94
      %p108 = scmp.eq.s32.totalorder %s18, 1
      %p109 = por %p107, %p108
      %p111 = scmp.ne.s32.totalorder %s94, %s110
      %p112 = scmp.eq.s32.totalorder %s18, 0
      %p113 = por %p111, %p112
      %p114 = scmp.le.s32.totalorder 1, %s12
      %p115 = scmp.lt.s32.totalorder %s12, 3
      %p116 = pnand %p114, %p115
      %p117 = pneg %p116
      // Predicated region
      $region9: #{tpu_custom_call.1} parent=5 // pred_check
        _
      $region10: #{tpu_custom_call.1} parent=5 // pred_check_branch
        %119 = sbr.rel (%p116) target = $region12
      $region11: #{tpu_custom_call.1} parent=5 // pred_region
        %s120 = ssub.s32 %s12, 1
        // Predicated region
        $region13: #{tpu_custom_call.1} parent=11 // pred_check
          %p121 = pneg %p59
        $region14: #{tpu_custom_call.1} parent=11 // pred_check_branch
          %123 = sbr.rel (%p121) target = $region16
        $region15: #{tpu_custom_call.1} parent=11 // pred_region
          _
        $region16: #{tpu_custom_call.1} parent=11 // pred_fallthru
          _
        // Predicated region
        $region17: #{tpu_custom_call.1} parent=11 // pred_check
          %p124 = pneg %p80
        $region18: #{tpu_custom_call.1} parent=11 // pred_check_branch
          %126 = sbr.rel (%p124) target = $region20
        $region19: #{tpu_custom_call.1} parent=11 // pred_region
          _
        $region20: #{tpu_custom_call.1} parent=11 // pred_fallthru
          _
      $region12: #{tpu_custom_call.1} parent=5 // pred_fallthru
        _
      %p127 = scmp.lt.s32.totalorder %s12, 2
      // Predicated region
      $region21: #{tpu_custom_call.1} parent=5 // pred_check
        %p128 = pneg %p127
      $region22: #{tpu_custom_call.1} parent=5 // pred_check_branch
        %130 = sbr.rel (%p128) target = $region24
      $region23: #{tpu_custom_call.1} parent=5 // pred_region
        // Predicated region
        $region25: #{tpu_custom_call.1} parent=23 // pred_check
          %p131 = pneg %p32
        $region26: #{tpu_custom_call.1} parent=23 // pred_check_branch
          %133 = sbr.rel (%p131) target = $region28
        $region27: #{tpu_custom_call.1} parent=23 // pred_region
          %s134 = smul.u32 8, %s12
          %p135 = scmp.lt.s32.totalorder %s134, 15
          %s136 = scalar_select %p135, %s134, 15
          %s137 = smul.addr %s136, 16
          %s138 = smul.addr %s137, 4
          %s139 = scalar_lea.vmem %s0, %s138
          %s140 = smul.u32 8, %s12
        $region28: #{tpu_custom_call.1} parent=23 // pred_fallthru
          _
      $region24: #{tpu_custom_call.1} parent=5 // pred_fallthru
        _
      %p141 = scmp.le.s32.totalorder 1, %s12
      %p142 = scmp.lt.s32.totalorder %s12, 3
      %p143 = pnand %p141, %p142
      %p144 = pneg %p143
      // Predicated region
      $region29: #{tpu_custom_call.1} parent=5 // pred_check
        _
      $region30: #{tpu_custom_call.1} parent=5 // pred_check_branch
        %146 = sbr.rel (%p143) target = $region32
      $region31: #{tpu_custom_call.1} parent=5 // pred_region
        %s147 = ssub.s32 %s12, 1
        %s148 = smul.u32 8, %s17
        %p149 = scmp.lt.s32.totalorder %s148, 15
        %s150 = scalar_select %p149, %s148, 15
        %s151 = smul.addr %s150, 16
        %s152 = smul.addr %s151, 4
        %s153 = scalar_lea.vmem %s0, %s152
        %p154 = pneg %p38
        %p155 = pneg %p35
        %p156 = pneg %p59
        %p157 = pneg %p56
        %p158 = pneg %p80
        %p159 = pneg %p77
        %p160 = pneg %p106
        %p161 = pneg %p103
        %s162 = sand.u32 %s93, 1
        %s163 = scalar_lea.sflag [#allocation3], %s162
        %s164 = sand.u32 %s93, 1
        %s165 = smul.addr %s164, 8
        %s166 = scalar_lea.vmem [#allocation2], %s165
        %s167 = smul.u32 8, %s17
        %p168 = scmp.lt.s32.totalorder %s167, 15
        %s169 = scalar_select %p168, %s167, 15
        %s170 = smul.addr %s169, 16
        %s171 = smul.addr %s170, 4
        %s172 = scalar_lea.vmem %s0, %s171
        %s173 = smul.u32 8, %s17
        %v175 = vld [vmem:[%s172] sm:$0xf]
        %v176 = vld [vmem:[%s172 + $0x4] sm:$0xf]
        %v177 = vld [vmem:[%s172 + $0x8] sm:$0xf]
        %v178 = vld [vmem:[%s172 + $0xc] sm:$0xf]
        %v179 = vld [vmem:[%s172 + $0x10] sm:$0xf]
        %v180 = vld [vmem:[%s172 + $0x14] sm:$0xf]
        %v181 = vld [vmem:[%s172 + $0x18] sm:$0xf]
        %v182 = vld [vmem:[%s172 + $0x1c] sm:$0xf]
        %v183 = vld [vmem:[%s172 + $0x20] sm:$0xf]
        %v184 = vld [vmem:[%s172 + $0x24] sm:$0xf]
        %v185 = vld [vmem:[%s172 + $0x28] sm:$0xf]
        %v186 = vld [vmem:[%s172 + $0x2c] sm:$0xf]
        %v187 = vld [vmem:[%s172 + $0x30] sm:$0xf]
        %v188 = vld [vmem:[%s172 + $0x34] sm:$0xf]
        %v189 = vld [vmem:[%s172 + $0x38] sm:$0xf]
        %v190 = vld [vmem:[%s172 + $0x3c] sm:$0xf]
        %v191 = vld [vmem:[%s172 + $0x40] sm:$0xf]
        %v192 = vld [vmem:[%s172 + $0x44] sm:$0xf]
        %v193 = vld [vmem:[%s172 + $0x48] sm:$0xf]
        %v194 = vld [vmem:[%s172 + $0x4c] sm:$0xf]
        %v195 = vld [vmem:[%s172 + $0x50] sm:$0xf]
        %v196 = vld [vmem:[%s172 + $0x54] sm:$0xf]
        %v197 = vld [vmem:[%s172 + $0x58] sm:$0xf]
        %v198 = vld [vmem:[%s172 + $0x5c] sm:$0xf]
        %v199 = vld [vmem:[%s172 + $0x60] sm:$0xf]
        %v200 = vld [vmem:[%s172 + $0x64] sm:$0xf]
        %v201 = vld [vmem:[%s172 + $0x68] sm:$0xf]
        %v202 = vld [vmem:[%s172 + $0x6c] sm:$0xf]
        %v203 = vld [vmem:[%s172 + $0x70] sm:$0xf]
        %v204 = vld [vmem:[%s172 + $0x74] sm:$0xf]
        %v205 = vld [vmem:[%s172 + $0x78] sm:$0xf]
        %v206 = vld [vmem:[%s172 + $0x7c] sm:$0xf]
        %v207 = vld [vmem:[%s172 + $0x80] sm:$0xf]
        %v208 = vld [vmem:[%s172 + $0x84] sm:$0xf]
        %v209 = vld [vmem:[%s172 + $0x88] sm:$0xf]
        %v210 = vld [vmem:[%s172 + $0x8c] sm:$0xf]
        %v211 = vld [vmem:[%s172 + $0x90] sm:$0xf]
        %v212 = vld [vmem:[%s172 + $0x94] sm:$0xf]
        %v213 = vld [vmem:[%s172 + $0x98] sm:$0xf]
        %v214 = vld [vmem:[%s172 + $0x9c] sm:$0xf]
        %v215 = vld [vmem:[%s172 + $0xa0] sm:$0xf]
        %v216 = vld [vmem:[%s172 + $0xa4] sm:$0xf]
        %v217 = vld [vmem:[%s172 + $0xa8] sm:$0xf]
        %v218 = vld [vmem:[%s172 + $0xac] sm:$0xf]
        %v219 = vld [vmem:[%s172 + $0xb0] sm:$0xf]
        %v220 = vld [vmem:[%s172 + $0xb4] sm:$0xf]
        %v221 = vld [vmem:[%s172 + $0xb8] sm:$0xf]
        %v222 = vld [vmem:[%s172 + $0xbc] sm:$0xf]
        %v223 = vld [vmem:[%s172 + $0xc0] sm:$0xf]
        %v224 = vld [vmem:[%s172 + $0xc4] sm:$0xf]
        %v225 = vld [vmem:[%s172 + $0xc8] sm:$0xf]
        %v226 = vld [vmem:[%s172 + $0xcc] sm:$0xf]
        %v227 = vld [vmem:[%s172 + $0xd0] sm:$0xf]
        %v228 = vld [vmem:[%s172 + $0xd4] sm:$0xf]
        %v229 = vld [vmem:[%s172 + $0xd8] sm:$0xf]
        %v230 = vld [vmem:[%s172 + $0xdc] sm:$0xf]
        %v231 = vld [vmem:[%s172 + $0xe0] sm:$0xf]
        %v232 = vld [vmem:[%s172 + $0xe4] sm:$0xf]
        %v233 = vld [vmem:[%s172 + $0xe8] sm:$0xf]
        %v234 = vld [vmem:[%s172 + $0xec] sm:$0xf]
        %v235 = vld [vmem:[%s172 + $0xf0] sm:$0xf]
        %v236 = vld [vmem:[%s172 + $0xf4] sm:$0xf]
        %v237 = vld [vmem:[%s172 + $0xf8] sm:$0xf]
        %v238 = vld [vmem:[%s172 + $0xfc] sm:$0xf]
        %v239 = vld [vmem:[%s172 + $0x100] sm:$0xf]
        %v240 = vld [vmem:[%s172 + $0x104] sm:$0xf]
        %v241 = vld [vmem:[%s172 + $0x108] sm:$0xf]
        %v242 = vld [vmem:[%s172 + $0x10c] sm:$0xf]
        %v243 = vld [vmem:[%s172 + $0x110] sm:$0xf]
        %v244 = vld [vmem:[%s172 + $0x114] sm:$0xf]
        %v245 = vld [vmem:[%s172 + $0x118] sm:$0xf]
        %v246 = vld [vmem:[%s172 + $0x11c] sm:$0xf]
        %v247 = vld [vmem:[%s172 + $0x120] sm:$0xf]
        %v248 = vld [vmem:[%s172 + $0x124] sm:$0xf]
        %v249 = vld [vmem:[%s172 + $0x128] sm:$0xf]
        %v250 = vld [vmem:[%s172 + $0x12c] sm:$0xf]
        %v251 = vld [vmem:[%s172 + $0x130] sm:$0xf]
        %v252 = vld [vmem:[%s172 + $0x134] sm:$0xf]
        %v253 = vld [vmem:[%s172 + $0x138] sm:$0xf]
        %v254 = vld [vmem:[%s172 + $0x13c] sm:$0xf]
        %v255 = vld [vmem:[%s172 + $0x140] sm:$0xf]
        %v256 = vld [vmem:[%s172 + $0x144] sm:$0xf]
        %v257 = vld [vmem:[%s172 + $0x148] sm:$0xf]
        %v258 = vld [vmem:[%s172 + $0x14c] sm:$0xf]
        %v259 = vld [vmem:[%s172 + $0x150] sm:$0xf]
        %v260 = vld [vmem:[%s172 + $0x154] sm:$0xf]
        %v261 = vld [vmem:[%s172 + $0x158] sm:$0xf]
        %v262 = vld [vmem:[%s172 + $0x15c] sm:$0xf]
        %v263 = vld [vmem:[%s172 + $0x160] sm:$0xf]
        %v264 = vld [vmem:[%s172 + $0x164] sm:$0xf]
        %v265 = vld [vmem:[%s172 + $0x168] sm:$0xf]
        %v266 = vld [vmem:[%s172 + $0x16c] sm:$0xf]
        %v267 = vld [vmem:[%s172 + $0x170] sm:$0xf]
        %v268 = vld [vmem:[%s172 + $0x174] sm:$0xf]
        %v269 = vld [vmem:[%s172 + $0x178] sm:$0xf]
        %v270 = vld [vmem:[%s172 + $0x17c] sm:$0xf]
        %v271 = vld [vmem:[%s172 + $0x180] sm:$0xf]
        %v272 = vld [vmem:[%s172 + $0x184] sm:$0xf]
        %v273 = vld [vmem:[%s172 + $0x188] sm:$0xf]
        %v274 = vld [vmem:[%s172 + $0x18c] sm:$0xf]
        %v275 = vld [vmem:[%s172 + $0x190] sm:$0xf]
        %v276 = vld [vmem:[%s172 + $0x194] sm:$0xf]
        %v277 = vld [vmem:[%s172 + $0x198] sm:$0xf]
        %v278 = vld [vmem:[%s172 + $0x19c] sm:$0xf]
        %v279 = vld [vmem:[%s172 + $0x1a0] sm:$0xf]
        %v280 = vld [vmem:[%s172 + $0x1a4] sm:$0xf]
        %v281 = vld [vmem:[%s172 + $0x1a8] sm:$0xf]
        %v282 = vld [vmem:[%s172 + $0x1ac] sm:$0xf]
        %v283 = vld [vmem:[%s172 + $0x1b0] sm:$0xf]
        %v284 = vld [vmem:[%s172 + $0x1b4] sm:$0xf]
        %v285 = vld [vmem:[%s172 + $0x1b8] sm:$0xf]
        %v286 = vld [vmem:[%s172 + $0x1bc] sm:$0xf]
        %v287 = vld [vmem:[%s172 + $0x1c0] sm:$0xf]
        %v288 = vld [vmem:[%s172 + $0x1c4] sm:$0xf]
        %v289 = vld [vmem:[%s172 + $0x1c8] sm:$0xf]
        %v290 = vld [vmem:[%s172 + $0x1cc] sm:$0xf]
        %v291 = vld [vmem:[%s172 + $0x1d0] sm:$0xf]
        %v292 = vld [vmem:[%s172 + $0x1d4] sm:$0xf]
        %v293 = vld [vmem:[%s172 + $0x1d8] sm:$0xf]
        %v294 = vld [vmem:[%s172 + $0x1dc] sm:$0xf]
        %v295 = vld [vmem:[%s172 + $0x1e0] sm:$0xf]
        %v296 = vld [vmem:[%s172 + $0x1e4] sm:$0xf]
        %v297 = vld [vmem:[%s172 + $0x1e8] sm:$0xf]
        %v298 = vld [vmem:[%s172 + $0x1ec] sm:$0xf]
        %v299 = vld [vmem:[%s172 + $0x1f0] sm:$0xf]
        %v300 = vld [vmem:[%s172 + $0x1f4] sm:$0xf]
        %v301 = vld [vmem:[%s172 + $0x1f8] sm:$0xf]
        %v302 = vld [vmem:[%s172 + $0x1fc] sm:$0xf]
        %v303 = vunpack.c.l.bf16 %v175
        %v304 = vunpack.c.l.bf16 %v176
        %v305 = vunpack.c.l.bf16 %v177
        %v306 = vunpack.c.l.bf16 %v178
        %v307 = vunpack.c.l.bf16 %v179
        %v308 = vunpack.c.l.bf16 %v180
        %v309 = vunpack.c.l.bf16 %v181
        %v310 = vunpack.c.l.bf16 %v182
        %v311 = vunpack.c.l.bf16 %v183
        %v312 = vunpack.c.l.bf16 %v184
        %v313 = vunpack.c.l.bf16 %v185
        %v314 = vunpack.c.l.bf16 %v186
        %v315 = vunpack.c.l.bf16 %v187
        %v316 = vunpack.c.l.bf16 %v188
        %v317 = vunpack.c.l.bf16 %v189
        %v318 = vunpack.c.l.bf16 %v190
        %v319 = vunpack.c.l.bf16 %v191
        %v320 = vunpack.c.l.bf16 %v192
        %v321 = vunpack.c.l.bf16 %v193
        %v322 = vunpack.c.l.bf16 %v194
        %v323 = vunpack.c.l.bf16 %v195
        %v324 = vunpack.c.l.bf16 %v196
        %v325 = vunpack.c.l.bf16 %v197
        %v326 = vunpack.c.l.bf16 %v198
        %v327 = vunpack.c.l.bf16 %v199
        %v328 = vunpack.c.l.bf16 %v200
        %v329 = vunpack.c.l.bf16 %v201
        %v330 = vunpack.c.l.bf16 %v202
        %v331 = vunpack.c.l.bf16 %v203
        %v332 = vunpack.c.l.bf16 %v204
        %v333 = vunpack.c.l.bf16 %v205
        %v334 = vunpack.c.l.bf16 %v206
        %v335 = vunpack.c.l.bf16 %v207
        %v336 = vunpack.c.l.bf16 %v208
        %v337 = vunpack.c.l.bf16 %v209
        %v338 = vunpack.c.l.bf16 %v210
        %v339 = vunpack.c.l.bf16 %v211
        %v340 = vunpack.c.l.bf16 %v212
        %v341 = vunpack.c.l.bf16 %v213
        %v342 = vunpack.c.l.bf16 %v214
        %v343 = vunpack.c.l.bf16 %v215
        %v344 = vunpack.c.l.bf16 %v216
        %v345 = vunpack.c.l.bf16 %v217
        %v346 = vunpack.c.l.bf16 %v218
        %v347 = vunpack.c.l.bf16 %v219
        %v348 = vunpack.c.l.bf16 %v220
        %v349 = vunpack.c.l.bf16 %v221
        %v350 = vunpack.c.l.bf16 %v222
        %v351 = vunpack.c.l.bf16 %v223
        %v352 = vunpack.c.l.bf16 %v224
        %v353 = vunpack.c.l.bf16 %v225
        %v354 = vunpack.c.l.bf16 %v226
        %v355 = vunpack.c.l.bf16 %v227
        %v356 = vunpack.c.l.bf16 %v228
        %v357 = vunpack.c.l.bf16 %v229
        %v358 = vunpack.c.l.bf16 %v230
        %v359 = vunpack.c.l.bf16 %v231
        %v360 = vunpack.c.l.bf16 %v232
        %v361 = vunpack.c.l.bf16 %v233
        %v362 = vunpack.c.l.bf16 %v234
        %v363 = vunpack.c.l.bf16 %v235
        %v364 = vunpack.c.l.bf16 %v236
        %v365 = vunpack.c.l.bf16 %v237
        %v366 = vunpack.c.l.bf16 %v238
        %v367 = vunpack.c.l.bf16 %v239
        %v368 = vunpack.c.l.bf16 %v240
        %v369 = vunpack.c.l.bf16 %v241
        %v370 = vunpack.c.l.bf16 %v242
        %v371 = vunpack.c.l.bf16 %v243
        %v372 = vunpack.c.l.bf16 %v244
        %v373 = vunpack.c.l.bf16 %v245
        %v374 = vunpack.c.l.bf16 %v246
        %v375 = vunpack.c.l.bf16 %v247
        %v376 = vunpack.c.l.bf16 %v248
        %v377 = vunpack.c.l.bf16 %v249
        %v378 = vunpack.c.l.bf16 %v250
        %v379 = vunpack.c.l.bf16 %v251
        %v380 = vunpack.c.l.bf16 %v252
        %v381 = vunpack.c.l.bf16 %v253
        %v382 = vunpack.c.l.bf16 %v254
        %v383 = vunpack.c.l.bf16 %v255
        %v384 = vunpack.c.l.bf16 %v256
        %v385 = vunpack.c.l.bf16 %v257
        %v386 = vunpack.c.l.bf16 %v258
        %v387 = vunpack.c.l.bf16 %v259
        %v388 = vunpack.c.l.bf16 %v260
        %v389 = vunpack.c.l.bf16 %v261
        %v390 = vunpack.c.l.bf16 %v262
        %v391 = vunpack.c.l.bf16 %v263
        %v392 = vunpack.c.l.bf16 %v264
        %v393 = vunpack.c.l.bf16 %v265
        %v394 = vunpack.c.l.bf16 %v266
        %v395 = vunpack.c.l.bf16 %v267
        %v396 = vunpack.c.l.bf16 %v268
        %v397 = vunpack.c.l.bf16 %v269
        %v398 = vunpack.c.l.bf16 %v270
        %v399 = vunpack.c.l.bf16 %v271
        %v400 = vunpack.c.l.bf16 %v272
        %v401 = vunpack.c.l.bf16 %v273
        %v402 = vunpack.c.l.bf16 %v274
        %v403 = vunpack.c.l.bf16 %v275
        %v404 = vunpack.c.l.bf16 %v276
        %v405 = vunpack.c.l.bf16 %v277
        %v406 = vunpack.c.l.bf16 %v278
        %v407 = vunpack.c.l.bf16 %v279
        %v408 = vunpack.c.l.bf16 %v280
        %v409 = vunpack.c.l.bf16 %v281
        %v410 = vunpack.c.l.bf16 %v282
        %v411 = vunpack.c.l.bf16 %v283
        %v412 = vunpack.c.l.bf16 %v284
        %v413 = vunpack.c.l.bf16 %v285
        %v414 = vunpack.c.l.bf16 %v286
        %v415 = vunpack.c.l.bf16 %v287
        %v416 = vunpack.c.l.bf16 %v288
        %v417 = vunpack.c.l.bf16 %v289
        %v418 = vunpack.c.l.bf16 %v290
        %v419 = vunpack.c.l.bf16 %v291
        %v420 = vunpack.c.l.bf16 %v292
        %v421 = vunpack.c.l.bf16 %v293
        %v422 = vunpack.c.l.bf16 %v294
        %v423 = vunpack.c.l.bf16 %v295
        %v424 = vunpack.c.l.bf16 %v296
        %v425 = vunpack.c.l.bf16 %v297
        %v426 = vunpack.c.l.bf16 %v298
        %v427 = vunpack.c.l.bf16 %v299
        %v428 = vunpack.c.l.bf16 %v300
        %v429 = vunpack.c.l.bf16 %v301
        %v430 = vunpack.c.l.bf16 %v302
        %vm431 = vcmask 400384
        %v432 = vsel %vm431, %v303, 0.0
        %433 = vadd.xlane.f32.xlu0 %v432
        %v434 = vpop.xlane.xlu0 %433
        %v435 = vsel %vm431, %v304, 0.0
        %436 = vadd.xlane.f32.xlu0 %v435
        %v437 = vpop.xlane.xlu0 %436
        %v438 = vsel %vm431, %v305, 0.0
        %439 = vadd.xlane.f32.xlu0 %v438
        %v440 = vpop.xlane.xlu0 %439
        %v441 = vsel %vm431, %v306, 0.0
        %442 = vadd.xlane.f32.xlu0 %v441
        %v443 = vpop.xlane.xlu0 %442
        %v444 = vsel %vm431, %v307, 0.0
        %445 = vadd.xlane.f32.xlu0 %v444
        %v446 = vpop.xlane.xlu0 %445
        %v447 = vsel %vm431, %v308, 0.0
        %448 = vadd.xlane.f32.xlu0 %v447
        %v449 = vpop.xlane.xlu0 %448
        %v450 = vsel %vm431, %v309, 0.0
        %451 = vadd.xlane.f32.xlu0 %v450
        %v452 = vpop.xlane.xlu0 %451
        %v453 = vsel %vm431, %v310, 0.0
        %454 = vadd.xlane.f32.xlu0 %v453
        %v455 = vpop.xlane.xlu0 %454
        %v456 = vsel %vm431, %v311, 0.0
        %457 = vadd.xlane.f32.xlu0 %v456
        %v458 = vpop.xlane.xlu0 %457
        %v459 = vsel %vm431, %v312, 0.0
        %460 = vadd.xlane.f32.xlu0 %v459
        %v461 = vpop.xlane.xlu0 %460
        %v462 = vsel %vm431, %v313, 0.0
        %463 = vadd.xlane.f32.xlu0 %v462
        %v464 = vpop.xlane.xlu0 %463
        %v465 = vsel %vm431, %v314, 0.0
        %466 = vadd.xlane.f32.xlu0 %v465
        %v467 = vpop.xlane.xlu0 %466
        %v468 = vsel %vm431, %v315, 0.0
        %469 = vadd.xlane.f32.xlu0 %v468
        %v470 = vpop.xlane.xlu0 %469
        %v471 = vsel %vm431, %v316, 0.0
        %472 = vadd.xlane.f32.xlu0 %v471
        %v473 = vpop.xlane.xlu0 %472
        %v474 = vsel %vm431, %v317, 0.0
        %475 = vadd.xlane.f32.xlu0 %v474
        %v476 = vpop.xlane.xlu0 %475
        %v477 = vsel %vm431, %v318, 0.0
        %478 = vadd.xlane.f32.xlu0 %v477
        %v479 = vpop.xlane.xlu0 %478
        %v480 = vsel %vm431, %v319, 0.0
        %481 = vadd.xlane.f32.xlu0 %v480
        %v482 = vpop.xlane.xlu0 %481
        %v483 = vsel %vm431, %v320, 0.0
        %484 = vadd.xlane.f32.xlu0 %v483
        %v485 = vpop.xlane.xlu0 %484
        %v486 = vsel %vm431, %v321, 0.0
        %487 = vadd.xlane.f32.xlu0 %v486
        %v488 = vpop.xlane.xlu0 %487
        %v489 = vsel %vm431, %v322, 0.0
        %490 = vadd.xlane.f32.xlu0 %v489
        %v491 = vpop.xlane.xlu0 %490
        %v492 = vsel %vm431, %v323, 0.0
        %493 = vadd.xlane.f32.xlu0 %v492
        %v494 = vpop.xlane.xlu0 %493
        %v495 = vsel %vm431, %v324, 0.0
        %496 = vadd.xlane.f32.xlu0 %v495
        %v497 = vpop.xlane.xlu0 %496
        %v498 = vsel %vm431, %v325, 0.0
        %499 = vadd.xlane.f32.xlu0 %v498
        %v500 = vpop.xlane.xlu0 %499
        %v501 = vsel %vm431, %v326, 0.0
        %502 = vadd.xlane.f32.xlu0 %v501
        %v503 = vpop.xlane.xlu0 %502
        %v504 = vsel %vm431, %v327, 0.0
        %505 = vadd.xlane.f32.xlu0 %v504
        %v506 = vpop.xlane.xlu0 %505
        %v507 = vsel %vm431, %v328, 0.0
        %508 = vadd.xlane.f32.xlu0 %v507
        %v509 = vpop.xlane.xlu0 %508
        %v510 = vsel %vm431, %v329, 0.0
        %511 = vadd.xlane.f32.xlu0 %v510
        %v512 = vpop.xlane.xlu0 %511
        %v513 = vsel %vm431, %v330, 0.0
        %514 = vadd.xlane.f32.xlu0 %v513
        %v515 = vpop.xlane.xlu0 %514
        %v516 = vsel %vm431, %v331, 0.0
        %517 = vadd.xlane.f32.xlu0 %v516
        %v518 = vpop.xlane.xlu0 %517
        %v519 = vsel %vm431, %v332, 0.0
        %520 = vadd.xlane.f32.xlu0 %v519
        %v521 = vpop.xlane.xlu0 %520
        %v522 = vsel %vm431, %v333, 0.0
        %523 = vadd.xlane.f32.xlu0 %v522
        %v524 = vpop.xlane.xlu0 %523
        %v525 = vsel %vm431, %v334, 0.0
        %526 = vadd.xlane.f32.xlu0 %v525
        %v527 = vpop.xlane.xlu0 %526
        %v528 = vsel %vm431, %v335, 0.0
        %529 = vadd.xlane.f32.xlu0 %v528
        %v530 = vpop.xlane.xlu0 %529
        %v531 = vsel %vm431, %v336, 0.0
        %532 = vadd.xlane.f32.xlu0 %v531
        %v533 = vpop.xlane.xlu0 %532
        %v534 = vsel %vm431, %v337, 0.0
        %535 = vadd.xlane.f32.xlu0 %v534
        %v536 = vpop.xlane.xlu0 %535
        %v537 = vsel %vm431, %v338, 0.0
        %538 = vadd.xlane.f32.xlu0 %v537
        %v539 = vpop.xlane.xlu0 %538
        %v540 = vsel %vm431, %v339, 0.0
        %541 = vadd.xlane.f32.xlu0 %v540
        %v542 = vpop.xlane.xlu0 %541
        %v543 = vsel %vm431, %v340, 0.0
        %544 = vadd.xlane.f32.xlu0 %v543
        %v545 = vpop.xlane.xlu0 %544
        %v546 = vsel %vm431, %v341, 0.0
        %547 = vadd.xlane.f32.xlu0 %v546
        %v548 = vpop.xlane.xlu0 %547
        %v549 = vsel %vm431, %v342, 0.0
        %550 = vadd.xlane.f32.xlu0 %v549
        %v551 = vpop.xlane.xlu0 %550
        %v552 = vsel %vm431, %v343, 0.0
        %553 = vadd.xlane.f32.xlu0 %v552
        %v554 = vpop.xlane.xlu0 %553
        %v555 = vsel %vm431, %v344, 0.0
        %556 = vadd.xlane.f32.xlu0 %v555
        %v557 = vpop.xlane.xlu0 %556
        %v558 = vsel %vm431, %v345, 0.0
        %559 = vadd.xlane.f32.xlu0 %v558
        %v560 = vpop.xlane.xlu0 %559
        %v561 = vsel %vm431, %v346, 0.0
        %562 = vadd.xlane.f32.xlu0 %v561
        %v563 = vpop.xlane.xlu0 %562
        %v564 = vsel %vm431, %v347, 0.0
        %565 = vadd.xlane.f32.xlu0 %v564
        %v566 = vpop.xlane.xlu0 %565
        %v567 = vsel %vm431, %v348, 0.0
        %568 = vadd.xlane.f32.xlu0 %v567
        %v569 = vpop.xlane.xlu0 %568
        %v570 = vsel %vm431, %v349, 0.0
        %571 = vadd.xlane.f32.xlu0 %v570
        %v572 = vpop.xlane.xlu0 %571
        %v573 = vsel %vm431, %v350, 0.0
        %574 = vadd.xlane.f32.xlu0 %v573
        %v575 = vpop.xlane.xlu0 %574
        %v576 = vsel %vm431, %v351, 0.0
        %577 = vadd.xlane.f32.xlu0 %v576
        %v578 = vpop.xlane.xlu0 %577
        %v579 = vsel %vm431, %v352, 0.0
        %580 = vadd.xlane.f32.xlu0 %v579
        %v581 = vpop.xlane.xlu0 %580
        %v582 = vsel %vm431, %v353, 0.0
        %583 = vadd.xlane.f32.xlu0 %v582
        %v584 = vpop.xlane.xlu0 %583
        %v585 = vsel %vm431, %v354, 0.0
        %586 = vadd.xlane.f32.xlu0 %v585
        %v587 = vpop.xlane.xlu0 %586
        %v588 = vsel %vm431, %v355, 0.0
        %589 = vadd.xlane.f32.xlu0 %v588
        %v590 = vpop.xlane.xlu0 %589
        %v591 = vsel %vm431, %v356, 0.0
        %592 = vadd.xlane.f32.xlu0 %v591
        %v593 = vpop.xlane.xlu0 %592
        %v594 = vsel %vm431, %v357, 0.0
        %595 = vadd.xlane.f32.xlu0 %v594
        %v596 = vpop.xlane.xlu0 %595
        %v597 = vsel %vm431, %v358, 0.0
        %598 = vadd.xlane.f32.xlu0 %v597
        %v599 = vpop.xlane.xlu0 %598
        %v600 = vsel %vm431, %v359, 0.0
        %601 = vadd.xlane.f32.xlu0 %v600
        %v602 = vpop.xlane.xlu0 %601
        %v603 = vsel %vm431, %v360, 0.0
        %604 = vadd.xlane.f32.xlu0 %v603
        %v605 = vpop.xlane.xlu0 %604
        %v606 = vsel %vm431, %v361, 0.0
        %607 = vadd.xlane.f32.xlu0 %v606
        %v608 = vpop.xlane.xlu0 %607
        %v609 = vsel %vm431, %v362, 0.0
        %610 = vadd.xlane.f32.xlu0 %v609
        %v611 = vpop.xlane.xlu0 %610
        %v612 = vsel %vm431, %v363, 0.0
        %613 = vadd.xlane.f32.xlu0 %v612
        %v614 = vpop.xlane.xlu0 %613
        %v615 = vsel %vm431, %v364, 0.0
        %616 = vadd.xlane.f32.xlu0 %v615
        %v617 = vpop.xlane.xlu0 %616
        %v618 = vsel %vm431, %v365, 0.0
        %619 = vadd.xlane.f32.xlu0 %v618
        %v620 = vpop.xlane.xlu0 %619
        %v621 = vsel %vm431, %v366, 0.0
        %622 = vadd.xlane.f32.xlu0 %v621
        %v623 = vpop.xlane.xlu0 %622
        %v624 = vsel %vm431, %v367, 0.0
        %625 = vadd.xlane.f32.xlu0 %v624
        %v626 = vpop.xlane.xlu0 %625
        %v627 = vsel %vm431, %v368, 0.0
        %628 = vadd.xlane.f32.xlu0 %v627
        %v629 = vpop.xlane.xlu0 %628
        %v630 = vsel %vm431, %v369, 0.0
        %631 = vadd.xlane.f32.xlu0 %v630
        %v632 = vpop.xlane.xlu0 %631
        %v633 = vsel %vm431, %v370, 0.0
        %634 = vadd.xlane.f32.xlu0 %v633
        %v635 = vpop.xlane.xlu0 %634
        %v636 = vsel %vm431, %v371, 0.0
        %637 = vadd.xlane.f32.xlu0 %v636
        %v638 = vpop.xlane.xlu0 %637
        %v639 = vsel %vm431, %v372, 0.0
        %640 = vadd.xlane.f32.xlu0 %v639
        %v641 = vpop.xlane.xlu0 %640
        %v642 = vsel %vm431, %v373, 0.0
        %643 = vadd.xlane.f32.xlu0 %v642
        %v644 = vpop.xlane.xlu0 %643
        %v645 = vsel %vm431, %v374, 0.0
        %646 = vadd.xlane.f32.xlu0 %v645
        %v647 = vpop.xlane.xlu0 %646
        %v648 = vsel %vm431, %v375, 0.0
        %649 = vadd.xlane.f32.xlu0 %v648
        %v650 = vpop.xlane.xlu0 %649
        %v651 = vsel %vm431, %v376, 0.0
        %652 = vadd.xlane.f32.xlu0 %v651
        %v653 = vpop.xlane.xlu0 %652
        %v654 = vsel %vm431, %v377, 0.0
        %655 = vadd.xlane.f32.xlu0 %v654
        %v656 = vpop.xlane.xlu0 %655
        %v657 = vsel %vm431, %v378, 0.0
        %658 = vadd.xlane.f32.xlu0 %v657
        %v659 = vpop.xlane.xlu0 %658
        %v660 = vsel %vm431, %v379, 0.0
        %661 = vadd.xlane.f32.xlu0 %v660
        %v662 = vpop.xlane.xlu0 %661
        %v663 = vsel %vm431, %v380, 0.0
        %664 = vadd.xlane.f32.xlu0 %v663
        %v665 = vpop.xlane.xlu0 %664
        %v666 = vsel %vm431, %v381, 0.0
        %667 = vadd.xlane.f32.xlu0 %v666
        %v668 = vpop.xlane.xlu0 %667
        %v669 = vsel %vm431, %v382, 0.0
        %670 = vadd.xlane.f32.xlu0 %v669
        %v671 = vpop.xlane.xlu0 %670
        %v672 = vsel %vm431, %v383, 0.0
        %673 = vadd.xlane.f32.xlu0 %v672
        %v674 = vpop.xlane.xlu0 %673
        %v675 = vsel %vm431, %v384, 0.0
        %676 = vadd.xlane.f32.xlu0 %v675
        %v677 = vpop.xlane.xlu0 %676
        %v678 = vsel %vm431, %v385, 0.0
        %679 = vadd.xlane.f32.xlu0 %v678
        %v680 = vpop.xlane.xlu0 %679
        %v681 = vsel %vm431, %v386, 0.0
        %682 = vadd.xlane.f32.xlu0 %v681
        %v683 = vpop.xlane.xlu0 %682
        %v684 = vsel %vm431, %v387, 0.0
        %685 = vadd.xlane.f32.xlu0 %v684
        %v686 = vpop.xlane.xlu0 %685
        %v687 = vsel %vm431, %v388, 0.0
        %688 = vadd.xlane.f32.xlu0 %v687
        %v689 = vpop.xlane.xlu0 %688
        %v690 = vsel %vm431, %v389, 0.0
        %691 = vadd.xlane.f32.xlu0 %v690
        %v692 = vpop.xlane.xlu0 %691
        %v693 = vsel %vm431, %v390, 0.0
        %694 = vadd.xlane.f32.xlu0 %v693
        %v695 = vpop.xlane.xlu0 %694
        %v696 = vsel %vm431, %v391, 0.0
        %697 = vadd.xlane.f32.xlu0 %v696
        %v698 = vpop.xlane.xlu0 %697
        %v699 = vsel %vm431, %v392, 0.0
        %700 = vadd.xlane.f32.xlu0 %v699
        %v701 = vpop.xlane.xlu0 %700
        %v702 = vsel %vm431, %v393, 0.0
        %703 = vadd.xlane.f32.xlu0 %v702
        %v704 = vpop.xlane.xlu0 %703
        %v705 = vsel %vm431, %v394, 0.0
        %706 = vadd.xlane.f32.xlu0 %v705
        %v707 = vpop.xlane.xlu0 %706
        %v708 = vsel %vm431, %v395, 0.0
        %709 = vadd.xlane.f32.xlu0 %v708
        %v710 = vpop.xlane.xlu0 %709
        %v711 = vsel %vm431, %v396, 0.0
        %712 = vadd.xlane.f32.xlu0 %v711
        %v713 = vpop.xlane.xlu0 %712
        %v714 = vsel %vm431, %v397, 0.0
        %715 = vadd.xlane.f32.xlu0 %v714
        %v716 = vpop.xlane.xlu0 %715
        %v717 = vsel %vm431, %v398, 0.0
        %718 = vadd.xlane.f32.xlu0 %v717
        %v719 = vpop.xlane.xlu0 %718
        %v720 = vsel %vm431, %v399, 0.0
        %721 = vadd.xlane.f32.xlu0 %v720
        %v722 = vpop.xlane.xlu0 %721
        %v723 = vsel %vm431, %v400, 0.0
        %724 = vadd.xlane.f32.xlu0 %v723
        %v725 = vpop.xlane.xlu0 %724
        %v726 = vsel %vm431, %v401, 0.0
        %727 = vadd.xlane.f32.xlu0 %v726
        %v728 = vpop.xlane.xlu0 %727
        %v729 = vsel %vm431, %v402, 0.0
        %730 = vadd.xlane.f32.xlu0 %v729
        %v731 = vpop.xlane.xlu0 %730
        %v732 = vsel %vm431, %v403, 0.0
        %733 = vadd.xlane.f32.xlu0 %v732
        %v734 = vpop.xlane.xlu0 %733
        %v735 = vsel %vm431, %v404, 0.0
        %736 = vadd.xlane.f32.xlu0 %v735
        %v737 = vpop.xlane.xlu0 %736
        %v738 = vsel %vm431, %v405, 0.0
        %739 = vadd.xlane.f32.xlu0 %v738
        %v740 = vpop.xlane.xlu0 %739
        %v741 = vsel %vm431, %v406, 0.0
        %742 = vadd.xlane.f32.xlu0 %v741
        %v743 = vpop.xlane.xlu0 %742
        %v744 = vsel %vm431, %v407, 0.0
        %745 = vadd.xlane.f32.xlu0 %v744
        %v746 = vpop.xlane.xlu0 %745
        %v747 = vsel %vm431, %v408, 0.0
        %748 = vadd.xlane.f32.xlu0 %v747
        %v749 = vpop.xlane.xlu0 %748
        %v750 = vsel %vm431, %v409, 0.0
        %751 = vadd.xlane.f32.xlu0 %v750
        %v752 = vpop.xlane.xlu0 %751
        %v753 = vsel %vm431, %v410, 0.0
        %754 = vadd.xlane.f32.xlu0 %v753
        %v755 = vpop.xlane.xlu0 %754
        %v756 = vsel %vm431, %v411, 0.0
        %757 = vadd.xlane.f32.xlu0 %v756
        %v758 = vpop.xlane.xlu0 %757
        %v759 = vsel %vm431, %v412, 0.0
        %760 = vadd.xlane.f32.xlu0 %v759
        %v761 = vpop.xlane.xlu0 %760
        %v762 = vsel %vm431, %v413, 0.0
        %763 = vadd.xlane.f32.xlu0 %v762
        %v764 = vpop.xlane.xlu0 %763
        %v765 = vsel %vm431, %v414, 0.0
        %766 = vadd.xlane.f32.xlu0 %v765
        %v767 = vpop.xlane.xlu0 %766
        %v768 = vsel %vm431, %v415, 0.0
        %769 = vadd.xlane.f32.xlu0 %v768
        %v770 = vpop.xlane.xlu0 %769
        %v771 = vsel %vm431, %v416, 0.0
        %772 = vadd.xlane.f32.xlu0 %v771
        %v773 = vpop.xlane.xlu0 %772
        %v774 = vsel %vm431, %v417, 0.0
        %775 = vadd.xlane.f32.xlu0 %v774
        %v776 = vpop.xlane.xlu0 %775
        %v777 = vsel %vm431, %v418, 0.0
        %778 = vadd.xlane.f32.xlu0 %v777
        %v779 = vpop.xlane.xlu0 %778
        %v780 = vsel %vm431, %v419, 0.0
        %781 = vadd.xlane.f32.xlu0 %v780
        %v782 = vpop.xlane.xlu0 %781
        %v783 = vsel %vm431, %v420, 0.0
        %784 = vadd.xlane.f32.xlu0 %v783
        %v785 = vpop.xlane.xlu0 %784
        %v786 = vsel %vm431, %v421, 0.0
        %787 = vadd.xlane.f32.xlu0 %v786
        %v788 = vpop.xlane.xlu0 %787
        %v789 = vsel %vm431, %v422, 0.0
        %790 = vadd.xlane.f32.xlu0 %v789
        %v791 = vpop.xlane.xlu0 %790
        %v792 = vsel %vm431, %v423, 0.0
        %793 = vadd.xlane.f32.xlu0 %v792
        %v794 = vpop.xlane.xlu0 %793
        %v795 = vsel %vm431, %v424, 0.0
        %796 = vadd.xlane.f32.xlu0 %v795
        %v797 = vpop.xlane.xlu0 %796
        %v798 = vsel %vm431, %v425, 0.0
        %799 = vadd.xlane.f32.xlu0 %v798
        %v800 = vpop.xlane.xlu0 %799
        %v801 = vsel %vm431, %v426, 0.0
        %802 = vadd.xlane.f32.xlu0 %v801
        %v803 = vpop.xlane.xlu0 %802
        %v804 = vsel %vm431, %v427, 0.0
        %805 = vadd.xlane.f32.xlu0 %v804
        %v806 = vpop.xlane.xlu0 %805
        %v807 = vsel %vm431, %v428, 0.0
        %808 = vadd.xlane.f32.xlu0 %v807
        %v809 = vpop.xlane.xlu0 %808
        %v810 = vsel %vm431, %v429, 0.0
        %811 = vadd.xlane.f32.xlu0 %v810
        %v812 = vpop.xlane.xlu0 %811
        %v813 = vsel %vm431, %v430, 0.0
        %814 = vadd.xlane.f32.xlu0 %v813
        %v815 = vpop.xlane.xlu0 %814
        %v816 = vpack.c.bf16 %v437, %v434
        %v817 = vpack.c.bf16 %v443, %v440
        %v818 = vpack.c.bf16 %v449, %v446
        %v819 = vpack.c.bf16 %v455, %v452
        %v820 = vpack.c.bf16 %v461, %v458
        %v821 = vpack.c.bf16 %v467, %v464
        %v822 = vpack.c.bf16 %v473, %v470
        %v823 = vpack.c.bf16 %v479, %v476
        %v824 = vpack.c.bf16 %v485, %v482
        %v825 = vpack.c.bf16 %v491, %v488
        %v826 = vpack.c.bf16 %v497, %v494
        %v827 = vpack.c.bf16 %v503, %v500
        %v828 = vpack.c.bf16 %v509, %v506
        %v829 = vpack.c.bf16 %v515, %v512
        %v830 = vpack.c.bf16 %v521, %v518
        %v831 = vpack.c.bf16 %v527, %v524
        %v832 = vpack.c.bf16 %v533, %v530
        %v833 = vpack.c.bf16 %v539, %v536
        %v834 = vpack.c.bf16 %v545, %v542
        %v835 = vpack.c.bf16 %v551, %v548
        %v836 = vpack.c.bf16 %v557, %v554
        %v837 = vpack.c.bf16 %v563, %v560
        %v838 = vpack.c.bf16 %v569, %v566
        %v839 = vpack.c.bf16 %v575, %v572
        %v840 = vpack.c.bf16 %v581, %v578
        %v841 = vpack.c.bf16 %v587, %v584
        %v842 = vpack.c.bf16 %v593, %v590
        %v843 = vpack.c.bf16 %v599, %v596
        %v844 = vpack.c.bf16 %v605, %v602
        %v845 = vpack.c.bf16 %v611, %v608
        %v846 = vpack.c.bf16 %v617, %v614
        %v847 = vpack.c.bf16 %v623, %v620
        %v848 = vpack.c.bf16 %v629, %v626
        %v849 = vpack.c.bf16 %v635, %v632
        %v850 = vpack.c.bf16 %v641, %v638
        %v851 = vpack.c.bf16 %v647, %v644
        %v852 = vpack.c.bf16 %v653, %v650
        %v853 = vpack.c.bf16 %v659, %v656
        %v854 = vpack.c.bf16 %v665, %v662
        %v855 = vpack.c.bf16 %v671, %v668
        %v856 = vpack.c.bf16 %v677, %v674
        %v857 = vpack.c.bf16 %v683, %v680
        %v858 = vpack.c.bf16 %v689, %v686
        %v859 = vpack.c.bf16 %v695, %v692
        %v860 = vpack.c.bf16 %v701, %v698
        %v861 = vpack.c.bf16 %v707, %v704
        %v862 = vpack.c.bf16 %v713, %v710
        %v863 = vpack.c.bf16 %v719, %v716
        %v864 = vpack.c.bf16 %v725, %v722
        %v865 = vpack.c.bf16 %v731, %v728
        %v866 = vpack.c.bf16 %v737, %v734
        %v867 = vpack.c.bf16 %v743, %v740
        %v868 = vpack.c.bf16 %v749, %v746
        %v869 = vpack.c.bf16 %v755, %v752
        %v870 = vpack.c.bf16 %v761, %v758
        %v871 = vpack.c.bf16 %v767, %v764
        %v872 = vpack.c.bf16 %v773, %v770
        %v873 = vpack.c.bf16 %v779, %v776
        %v874 = vpack.c.bf16 %v785, %v782
        %v875 = vpack.c.bf16 %v791, %v788
        %v876 = vpack.c.bf16 %v797, %v794
        %v877 = vpack.c.bf16 %v803, %v800
        %v878 = vpack.c.bf16 %v809, %v806
        %v879 = vpack.c.bf16 %v815, %v812
        %v880 = vld [vmem:[%s1] sm:$0xf]
        %v881 = vld [vmem:[%s1 + $0x4] sm:$0xf]
        %v882 = vld [vmem:[%s1 + $0x8] sm:$0xf]
        %v883 = vld [vmem:[%s1 + $0xc] sm:$0xf]
        %v884 = vld [vmem:[%s1 + $0x10] sm:$0xf]
        %v885 = vld [vmem:[%s1 + $0x14] sm:$0xf]
        %v886 = vld [vmem:[%s1 + $0x18] sm:$0xf]
        %v887 = vld [vmem:[%s1 + $0x1c] sm:$0xf]
        %v888 = vld [vmem:[%s1 + $0x20] sm:$0xf]
        %v889 = vld [vmem:[%s1 + $0x24] sm:$0xf]
        %v890 = vld [vmem:[%s1 + $0x28] sm:$0xf]
        %v891 = vld [vmem:[%s1 + $0x2c] sm:$0xf]
        %v892 = vld [vmem:[%s1 + $0x30] sm:$0xf]
        %v893 = vld [vmem:[%s1 + $0x34] sm:$0xf]
        %v894 = vld [vmem:[%s1 + $0x38] sm:$0xf]
        %v895 = vld [vmem:[%s1 + $0x3c] sm:$0xf]
        %v896 = vld [vmem:[%s2] sm:$0x1]
        %v898 = vlaneseq
        %v899 = vshrl.u32 %v898, 7
        %v900 = vsub.s32 0, %v899
        %v901 = vrot.slane %v896, %v900
        %v967 = vunpack.c.l.b16 %v816
        %v968 = vunpack.c.h.b16 %v816
        %v969 = vunpack.c.l.b16 %v817
        %v970 = vunpack.c.h.b16 %v817
        %v971 = vunpack.c.l.b16 %v818
        %v972 = vunpack.c.h.b16 %v818
        %v973 = vunpack.c.l.b16 %v819
        %v974 = vunpack.c.h.b16 %v819
        %v975 = vunpack.c.l.b16 %v820
        %v976 = vunpack.c.h.b16 %v820
        %v977 = vunpack.c.l.b16 %v821
        %v978 = vunpack.c.h.b16 %v821
        %v979 = vunpack.c.l.b16 %v822
        %v980 = vunpack.c.h.b16 %v822
        %v981 = vunpack.c.l.b16 %v823
        %v982 = vunpack.c.h.b16 %v823
        %v983 = vunpack.c.l.b16 %v824
        %v984 = vunpack.c.h.b16 %v824
        %v985 = vunpack.c.l.b16 %v825
        %v986 = vunpack.c.h.b16 %v825
        %v987 = vunpack.c.l.b16 %v826
        %v988 = vunpack.c.h.b16 %v826
        %v989 = vunpack.c.l.b16 %v827
        %v990 = vunpack.c.h.b16 %v827
        %v991 = vunpack.c.l.b16 %v828
        %v992 = vunpack.c.h.b16 %v828
        %v993 = vunpack.c.l.b16 %v829
        %v994 = vunpack.c.h.b16 %v829
        %v995 = vunpack.c.l.b16 %v830
        %v996 = vunpack.c.h.b16 %v830
        %v997 = vunpack.c.l.b16 %v831
        %v998 = vunpack.c.h.b16 %v831
        %v999 = vunpack.c.l.b16 %v832
        %v1000 = vunpack.c.h.b16 %v832
        %v1001 = vunpack.c.l.b16 %v833
        %v1002 = vunpack.c.h.b16 %v833
        %v1003 = vunpack.c.l.b16 %v834
        %v1004 = vunpack.c.h.b16 %v834
        %v1005 = vunpack.c.l.b16 %v835
        %v1006 = vunpack.c.h.b16 %v835
        %v1007 = vunpack.c.l.b16 %v836
        %v1008 = vunpack.c.h.b16 %v836
        %v1009 = vunpack.c.l.b16 %v837
        %v1010 = vunpack.c.h.b16 %v837
        %v1011 = vunpack.c.l.b16 %v838
        %v1012 = vunpack.c.h.b16 %v838
        %v1013 = vunpack.c.l.b16 %v839
        %v1014 = vunpack.c.h.b16 %v839
        %v1015 = vunpack.c.l.b16 %v840
        %v1016 = vunpack.c.h.b16 %v840
        %v1017 = vunpack.c.l.b16 %v841
        %v1018 = vunpack.c.h.b16 %v841
        %v1019 = vunpack.c.l.b16 %v842
        %v1020 = vunpack.c.h.b16 %v842
        %v1021 = vunpack.c.l.b16 %v843
        %v1022 = vunpack.c.h.b16 %v843
        %v1023 = vunpack.c.l.b16 %v844
        %v1024 = vunpack.c.h.b16 %v844
        %v1025 = vunpack.c.l.b16 %v845
        %v1026 = vunpack.c.h.b16 %v845
        %v1027 = vunpack.c.l.b16 %v846
        %v1028 = vunpack.c.h.b16 %v846
        %v1029 = vunpack.c.l.b16 %v847
        %v1030 = vunpack.c.h.b16 %v847
        %v1031 = vunpack.c.l.b16 %v848
        %v1032 = vunpack.c.h.b16 %v848
        %v1033 = vunpack.c.l.b16 %v849
        %v1034 = vunpack.c.h.b16 %v849
        %v1035 = vunpack.c.l.b16 %v850
        %v1036 = vunpack.c.h.b16 %v850
        %v1037 = vunpack.c.l.b16 %v851
        %v1038 = vunpack.c.h.b16 %v851
        %v1039 = vunpack.c.l.b16 %v852
        %v1040 = vunpack.c.h.b16 %v852
        %v1041 = vunpack.c.l.b16 %v853
        %v1042 = vunpack.c.h.b16 %v853
        %v1043 = vunpack.c.l.b16 %v854
        %v1044 = vunpack.c.h.b16 %v854
        %v1045 = vunpack.c.l.b16 %v855
        %v1046 = vunpack.c.h.b16 %v855
        %v1047 = vunpack.c.l.b16 %v856
        %v1048 = vunpack.c.h.b16 %v856
        %v1049 = vunpack.c.l.b16 %v857
        %v1050 = vunpack.c.h.b16 %v857
        %v1051 = vunpack.c.l.b16 %v858
        %v1052 = vunpack.c.h.b16 %v858
        %v1053 = vunpack.c.l.b16 %v859
        %v1054 = vunpack.c.h.b16 %v859
        %v1055 = vunpack.c.l.b16 %v860
        %v1056 = vunpack.c.h.b16 %v860
        %v1057 = vunpack.c.l.b16 %v861
        %v1058 = vunpack.c.h.b16 %v861
        %v1059 = vunpack.c.l.b16 %v862
        %v1060 = vunpack.c.h.b16 %v862
        %v1061 = vunpack.c.l.b16 %v863
        %v1062 = vunpack.c.h.b16 %v863
        %v1063 = vunpack.c.l.b16 %v864
        %v1064 = vunpack.c.h.b16 %v864
        %v1065 = vunpack.c.l.b16 %v865
        %v1066 = vunpack.c.h.b16 %v865
        %v1067 = vunpack.c.l.b16 %v866
        %v1068 = vunpack.c.h.b16 %v866
        %v1069 = vunpack.c.l.b16 %v867
        %v1070 = vunpack.c.h.b16 %v867
        %v1071 = vunpack.c.l.b16 %v868
        %v1072 = vunpack.c.h.b16 %v868
        %v1073 = vunpack.c.l.b16 %v869
        %v1074 = vunpack.c.h.b16 %v869
        %v1075 = vunpack.c.l.b16 %v870
        %v1076 = vunpack.c.h.b16 %v870
        %v1077 = vunpack.c.l.b16 %v871
        %v1078 = vunpack.c.h.b16 %v871
        %v1079 = vunpack.c.l.b16 %v872
        %v1080 = vunpack.c.h.b16 %v872
        %v1081 = vunpack.c.l.b16 %v873
        %v1082 = vunpack.c.h.b16 %v873
        %v1083 = vunpack.c.l.b16 %v874
        %v1084 = vunpack.c.h.b16 %v874
        %v1085 = vunpack.c.l.b16 %v875
        %v1086 = vunpack.c.h.b16 %v875
        %v1087 = vunpack.c.l.b16 %v876
        %v1088 = vunpack.c.h.b16 %v876
        %v1089 = vunpack.c.l.b16 %v877
        %v1090 = vunpack.c.h.b16 %v877
        %v1091 = vunpack.c.l.b16 %v878
        %v1092 = vunpack.c.h.b16 %v878
        %v1093 = vunpack.c.l.b16 %v879
        %v1094 = vunpack.c.h.b16 %v879
        %v1095 = vlaneseq
        %v1096 = vand.u32 %v1095, 127
        %v1097 = vlaneseq
        %v1098 = vshrl.u32 %v1097, 7
        %v1099 = vsub.s32 %v1096, %v1098
        %v1100 = vrot.slane %v967, %v1099
        %v1101 = vadd.s32 %v1096, 4294967288
        %v1102 = vlaneseq
        %v1103 = vshrl.u32 %v1102, 7
        %v1104 = vsub.s32 %v1101, %v1103
        %v1105 = vrot.slane %v968, %v1104
        %vm1106 = vcmask 130112
        %v1107 = vsel %vm1106, %v1105, %v1100
        %v1108 = vadd.s32 %v1096, 4294967280
        %v1109 = vlaneseq
        %v1110 = vshrl.u32 %v1109, 7
        %v1111 = vsub.s32 %v1108, %v1110
        %v1112 = vrot.slane %v969, %v1111
        %vm1113 = vcmask 195712
        %v1114 = vsel %vm1113, %v1112, %v1107
        %v1115 = vadd.s32 %v1096, 4294967272
        %v1116 = vlaneseq
        %v1117 = vshrl.u32 %v1116, 7
        %v1118 = vsub.s32 %v1115, %v1117
        %v1119 = vrot.slane %v970, %v1118
        %vm1120 = vcmask 261312
        %v1121 = vsel %vm1120, %v1119, %v1114
        %v1122 = vadd.s32 %v1096, 4294967264
        %v1123 = vlaneseq
        %v1124 = vshrl.u32 %v1123, 7
        %v1125 = vsub.s32 %v1122, %v1124
        %v1126 = vrot.slane %v971, %v1125
        %vm1127 = vcmask 326912
        %v1128 = vsel %vm1127, %v1126, %v1121
        %v1129 = vadd.s32 %v1096, 4294967256
        %v1130 = vlaneseq
        %v1131 = vshrl.u32 %v1130, 7
        %v1132 = vsub.s32 %v1129, %v1131
        %v1133 = vrot.slane %v972, %v1132
        %vm1134 = vcmask 392512
        %v1135 = vsel %vm1134, %v1133, %v1128
        %v1136 = vadd.s32 %v1096, 4294967248
        %v1137 = vlaneseq
        %v1138 = vshrl.u32 %v1137, 7
        %v1139 = vsub.s32 %v1136, %v1138
        %v1140 = vrot.slane %v973, %v1139
        %vm1141 = vcmask 458112
        %v1142 = vsel %vm1141, %v1140, %v1135
        %v1143 = vadd.s32 %v1096, 4294967240
        %v1144 = vlaneseq
        %v1145 = vshrl.u32 %v1144, 7
        %v1146 = vsub.s32 %v1143, %v1145
        %v1147 = vrot.slane %v974, %v1146
        %vm1148 = vcmask 523712
        %v1149 = vsel %vm1148, %v1147, %v1142
        %v1150 = vadd.s32 %v1096, 4294967232
        %v1151 = vlaneseq
        %v1152 = vshrl.u32 %v1151, 7
        %v1153 = vsub.s32 %v1150, %v1152
        %v1154 = vrot.slane %v975, %v1153
        %vm1155 = vcmask 589312
        %v1156 = vsel %vm1155, %v1154, %v1149
        %v1157 = vadd.s32 %v1096, 4294967224
        %v1158 = vlaneseq
        %v1159 = vshrl.u32 %v1158, 7
        %v1160 = vsub.s32 %v1157, %v1159
        %v1161 = vrot.slane %v976, %v1160
        %vm1162 = vcmask 654912
        %v1163 = vsel %vm1162, %v1161, %v1156
        %v1164 = vadd.s32 %v1096, 4294967216
        %v1165 = vlaneseq
        %v1166 = vshrl.u32 %v1165, 7
        %v1167 = vsub.s32 %v1164, %v1166
        %v1168 = vrot.slane %v977, %v1167
        %vm1169 = vcmask 720512
        %v1170 = vsel %vm1169, %v1168, %v1163
        %v1171 = vadd.s32 %v1096, 4294967208
        %v1172 = vlaneseq
        %v1173 = vshrl.u32 %v1172, 7
        %v1174 = vsub.s32 %v1171, %v1173
        %v1175 = vrot.slane %v978, %v1174
        %vm1176 = vcmask 786112
        %v1177 = vsel %vm1176, %v1175, %v1170
        %v1178 = vadd.s32 %v1096, 4294967200
        %v1179 = vlaneseq
        %v1180 = vshrl.u32 %v1179, 7
        %v1181 = vsub.s32 %v1178, %v1180
        %v1182 = vrot.slane %v979, %v1181
        %vm1183 = vcmask 851712
        %v1184 = vsel %vm1183, %v1182, %v1177
        %v1185 = vadd.s32 %v1096, 4294967192
        %v1186 = vlaneseq
        %v1187 = vshrl.u32 %v1186, 7
        %v1188 = vsub.s32 %v1185, %v1187
        %v1189 = vrot.slane %v980, %v1188
        %vm1190 = vcmask 917312
        %v1191 = vsel %vm1190, %v1189, %v1184
        %v1192 = vadd.s32 %v1096, 4294967184
        %v1193 = vlaneseq
        %v1194 = vshrl.u32 %v1193, 7
        %v1195 = vsub.s32 %v1192, %v1194
        %v1196 = vrot.slane %v981, %v1195
        %vm1197 = vcmask 982912
        %v1198 = vsel %vm1197, %v1196, %v1191
        %v1199 = vadd.s32 %v1096, 4294967176
        %v1200 = vlaneseq
        %v1201 = vshrl.u32 %v1200, 7
        %v1202 = vsub.s32 %v1199, %v1201
        %v1203 = vrot.slane %v982, %v1202
        %vm1204 = vcmask 1048512
        %v1205 = vsel %vm1204, %v1203, %v1198
        %v1206 = vlaneseq
        %v1207 = vshrl.u32 %v1206, 7
        %v1208 = vsub.s32 %v1096, %v1207
        %v1209 = vrot.slane %v983, %v1208
        %v1210 = vlaneseq
        %v1211 = vshrl.u32 %v1210, 7
        %v1212 = vsub.s32 %v1101, %v1211
        %v1213 = vrot.slane %v984, %v1212
        %v1214 = vsel %vm1106, %v1213, %v1209
        %v1215 = vlaneseq
        %v1216 = vshrl.u32 %v1215, 7
        %v1217 = vsub.s32 %v1108, %v1216
        %v1218 = vrot.slane %v985, %v1217
        %v1219 = vsel %vm1113, %v1218, %v1214
        %v1220 = vlaneseq
        %v1221 = vshrl.u32 %v1220, 7
        %v1222 = vsub.s32 %v1115, %v1221
        %v1223 = vrot.slane %v986, %v1222
        %v1224 = vsel %vm1120, %v1223, %v1219
        %v1225 = vlaneseq
        %v1226 = vshrl.u32 %v1225, 7
        %v1227 = vsub.s32 %v1122, %v1226
        %v1228 = vrot.slane %v987, %v1227
        %v1229 = vsel %vm1127, %v1228, %v1224
        %v1230 = vlaneseq
        %v1231 = vshrl.u32 %v1230, 7
        %v1232 = vsub.s32 %v1129, %v1231
        %v1233 = vrot.slane %v988, %v1232
        %v1234 = vsel %vm1134, %v1233, %v1229
        %v1235 = vlaneseq
        %v1236 = vshrl.u32 %v1235, 7
        %v1237 = vsub.s32 %v1136, %v1236
        %v1238 = vrot.slane %v989, %v1237
        %v1239 = vsel %vm1141, %v1238, %v1234
        %v1240 = vlaneseq
        %v1241 = vshrl.u32 %v1240, 7
        %v1242 = vsub.s32 %v1143, %v1241
        %v1243 = vrot.slane %v990, %v1242
        %v1244 = vsel %vm1148, %v1243, %v1239
        %v1245 = vlaneseq
        %v1246 = vshrl.u32 %v1245, 7
        %v1247 = vsub.s32 %v1150, %v1246
        %v1248 = vrot.slane %v991, %v1247
        %v1249 = vsel %vm1155, %v1248, %v1244
        %v1250 = vlaneseq
        %v1251 = vshrl.u32 %v1250, 7
        %v1252 = vsub.s32 %v1157, %v1251
        %v1253 = vrot.slane %v992, %v1252
        %v1254 = vsel %vm1162, %v1253, %v1249
        %v1255 = vlaneseq
        %v1256 = vshrl.u32 %v1255, 7
        %v1257 = vsub.s32 %v1164, %v1256
        %v1258 = vrot.slane %v993, %v1257
        %v1259 = vsel %vm1169, %v1258, %v1254
        %v1260 = vlaneseq
        %v1261 = vshrl.u32 %v1260, 7
        %v1262 = vsub.s32 %v1171, %v1261
        %v1263 = vrot.slane %v994, %v1262
        %v1264 = vsel %vm1176, %v1263, %v1259
        %v1265 = vlaneseq
        %v1266 = vshrl.u32 %v1265, 7
        %v1267 = vsub.s32 %v1178, %v1266
        %v1268 = vrot.slane %v995, %v1267
        %v1269 = vsel %vm1183, %v1268, %v1264
        %v1270 = vlaneseq
        %v1271 = vshrl.u32 %v1270, 7
        %v1272 = vsub.s32 %v1185, %v1271
        %v1273 = vrot.slane %v996, %v1272
        %v1274 = vsel %vm1190, %v1273, %v1269
        %v1275 = vlaneseq
        %v1276 = vshrl.u32 %v1275, 7
        %v1277 = vsub.s32 %v1192, %v1276
        %v1278 = vrot.slane %v997, %v1277
        %v1279 = vsel %vm1197, %v1278, %v1274
        %v1280 = vlaneseq
        %v1281 = vshrl.u32 %v1280, 7
        %v1282 = vsub.s32 %v1199, %v1281
        %v1283 = vrot.slane %v998, %v1282
        %v1284 = vsel %vm1204, %v1283, %v1279
        %v1285 = vlaneseq
        %v1286 = vshrl.u32 %v1285, 7
        %v1287 = vsub.s32 %v1096, %v1286
        %v1288 = vrot.slane %v999, %v1287
        %v1289 = vlaneseq
        %v1290 = vshrl.u32 %v1289, 7
        %v1291 = vsub.s32 %v1101, %v1290
        %v1292 = vrot.slane %v1000, %v1291
        %v1293 = vsel %vm1106, %v1292, %v1288
        %v1294 = vlaneseq
        %v1295 = vshrl.u32 %v1294, 7
        %v1296 = vsub.s32 %v1108, %v1295
        %v1297 = vrot.slane %v1001, %v1296
        %v1298 = vsel %vm1113, %v1297, %v1293
        %v1299 = vlaneseq
        %v1300 = vshrl.u32 %v1299, 7
        %v1301 = vsub.s32 %v1115, %v1300
        %v1302 = vrot.slane %v1002, %v1301
        %v1303 = vsel %vm1120, %v1302, %v1298
        %v1304 = vlaneseq
        %v1305 = vshrl.u32 %v1304, 7
        %v1306 = vsub.s32 %v1122, %v1305
        %v1307 = vrot.slane %v1003, %v1306
        %v1308 = vsel %vm1127, %v1307, %v1303
        %v1309 = vlaneseq
        %v1310 = vshrl.u32 %v1309, 7
        %v1311 = vsub.s32 %v1129, %v1310
        %v1312 = vrot.slane %v1004, %v1311
        %v1313 = vsel %vm1134, %v1312, %v1308
        %v1314 = vlaneseq
        %v1315 = vshrl.u32 %v1314, 7
        %v1316 = vsub.s32 %v1136, %v1315
        %v1317 = vrot.slane %v1005, %v1316
        %v1318 = vsel %vm1141, %v1317, %v1313
        %v1319 = vlaneseq
        %v1320 = vshrl.u32 %v1319, 7
        %v1321 = vsub.s32 %v1143, %v1320
        %v1322 = vrot.slane %v1006, %v1321
        %v1323 = vsel %vm1148, %v1322, %v1318
        %v1324 = vlaneseq
        %v1325 = vshrl.u32 %v1324, 7
        %v1326 = vsub.s32 %v1150, %v1325
        %v1327 = vrot.slane %v1007, %v1326
        %v1328 = vsel %vm1155, %v1327, %v1323
        %v1329 = vlaneseq
        %v1330 = vshrl.u32 %v1329, 7
        %v1331 = vsub.s32 %v1157, %v1330
        %v1332 = vrot.slane %v1008, %v1331
        %v1333 = vsel %vm1162, %v1332, %v1328
        %v1334 = vlaneseq
        %v1335 = vshrl.u32 %v1334, 7
        %v1336 = vsub.s32 %v1164, %v1335
        %v1337 = vrot.slane %v1009, %v1336
        %v1338 = vsel %vm1169, %v1337, %v1333
        %v1339 = vlaneseq
        %v1340 = vshrl.u32 %v1339, 7
        %v1341 = vsub.s32 %v1171, %v1340
        %v1342 = vrot.slane %v1010, %v1341
        %v1343 = vsel %vm1176, %v1342, %v1338
        %v1344 = vlaneseq
        %v1345 = vshrl.u32 %v1344, 7
        %v1346 = vsub.s32 %v1178, %v1345
        %v1347 = vrot.slane %v1011, %v1346
        %v1348 = vsel %vm1183, %v1347, %v1343
        %v1349 = vlaneseq
        %v1350 = vshrl.u32 %v1349, 7
        %v1351 = vsub.s32 %v1185, %v1350
        %v1352 = vrot.slane %v1012, %v1351
        %v1353 = vsel %vm1190, %v1352, %v1348
        %v1354 = vlaneseq
        %v1355 = vshrl.u32 %v1354, 7
        %v1356 = vsub.s32 %v1192, %v1355
        %v1357 = vrot.slane %v1013, %v1356
        %v1358 = vsel %vm1197, %v1357, %v1353
        %v1359 = vlaneseq
        %v1360 = vshrl.u32 %v1359, 7
        %v1361 = vsub.s32 %v1199, %v1360
        %v1362 = vrot.slane %v1014, %v1361
        %v1363 = vsel %vm1204, %v1362, %v1358
        %v1364 = vlaneseq
        %v1365 = vshrl.u32 %v1364, 7
        %v1366 = vsub.s32 %v1096, %v1365
        %v1367 = vrot.slane %v1015, %v1366
        %v1368 = vlaneseq
        %v1369 = vshrl.u32 %v1368, 7
        %v1370 = vsub.s32 %v1101, %v1369
        %v1371 = vrot.slane %v1016, %v1370
        %v1372 = vsel %vm1106, %v1371, %v1367
        %v1373 = vlaneseq
        %v1374 = vshrl.u32 %v1373, 7
        %v1375 = vsub.s32 %v1108, %v1374
        %v1376 = vrot.slane %v1017, %v1375
        %v1377 = vsel %vm1113, %v1376, %v1372
        %v1378 = vlaneseq
        %v1379 = vshrl.u32 %v1378, 7
        %v1380 = vsub.s32 %v1115, %v1379
        %v1381 = vrot.slane %v1018, %v1380
        %v1382 = vsel %vm1120, %v1381, %v1377
        %v1383 = vlaneseq
        %v1384 = vshrl.u32 %v1383, 7
        %v1385 = vsub.s32 %v1122, %v1384
        %v1386 = vrot.slane %v1019, %v1385
        %v1387 = vsel %vm1127, %v1386, %v1382
        %v1388 = vlaneseq
        %v1389 = vshrl.u32 %v1388, 7
        %v1390 = vsub.s32 %v1129, %v1389
        %v1391 = vrot.slane %v1020, %v1390
        %v1392 = vsel %vm1134, %v1391, %v1387
        %v1393 = vlaneseq
        %v1394 = vshrl.u32 %v1393, 7
        %v1395 = vsub.s32 %v1136, %v1394
        %v1396 = vrot.slane %v1021, %v1395
        %v1397 = vsel %vm1141, %v1396, %v1392
        %v1398 = vlaneseq
        %v1399 = vshrl.u32 %v1398, 7
        %v1400 = vsub.s32 %v1143, %v1399
        %v1401 = vrot.slane %v1022, %v1400
        %v1402 = vsel %vm1148, %v1401, %v1397
        %v1403 = vlaneseq
        %v1404 = vshrl.u32 %v1403, 7
        %v1405 = vsub.s32 %v1150, %v1404
        %v1406 = vrot.slane %v1023, %v1405
        %v1407 = vsel %vm1155, %v1406, %v1402
        %v1408 = vlaneseq
        %v1409 = vshrl.u32 %v1408, 7
        %v1410 = vsub.s32 %v1157, %v1409
        %v1411 = vrot.slane %v1024, %v1410
        %v1412 = vsel %vm1162, %v1411, %v1407
        %v1413 = vlaneseq
        %v1414 = vshrl.u32 %v1413, 7
        %v1415 = vsub.s32 %v1164, %v1414
        %v1416 = vrot.slane %v1025, %v1415
        %v1417 = vsel %vm1169, %v1416, %v1412
        %v1418 = vlaneseq
        %v1419 = vshrl.u32 %v1418, 7
        %v1420 = vsub.s32 %v1171, %v1419
        %v1421 = vrot.slane %v1026, %v1420
        %v1422 = vsel %vm1176, %v1421, %v1417
        %v1423 = vlaneseq
        %v1424 = vshrl.u32 %v1423, 7
        %v1425 = vsub.s32 %v1178, %v1424
        %v1426 = vrot.slane %v1027, %v1425
        %v1427 = vsel %vm1183, %v1426, %v1422
        %v1428 = vlaneseq
        %v1429 = vshrl.u32 %v1428, 7
        %v1430 = vsub.s32 %v1185, %v1429
        %v1431 = vrot.slane %v1028, %v1430
        %v1432 = vsel %vm1190, %v1431, %v1427
        %v1433 = vlaneseq
        %v1434 = vshrl.u32 %v1433, 7
        %v1435 = vsub.s32 %v1192, %v1434
        %v1436 = vrot.slane %v1029, %v1435
        %v1437 = vsel %vm1197, %v1436, %v1432
        %v1438 = vlaneseq
        %v1439 = vshrl.u32 %v1438, 7
        %v1440 = vsub.s32 %v1199, %v1439
        %v1441 = vrot.slane %v1030, %v1440
        %v1442 = vsel %vm1204, %v1441, %v1437
        %v1443 = vlaneseq
        %v1444 = vshrl.u32 %v1443, 7
        %v1445 = vsub.s32 %v1096, %v1444
        %v1446 = vrot.slane %v1031, %v1445
        %v1447 = vlaneseq
        %v1448 = vshrl.u32 %v1447, 7
        %v1449 = vsub.s32 %v1101, %v1448
        %v1450 = vrot.slane %v1032, %v1449
        %v1451 = vsel %vm1106, %v1450, %v1446
        %v1452 = vlaneseq
        %v1453 = vshrl.u32 %v1452, 7
        %v1454 = vsub.s32 %v1108, %v1453
        %v1455 = vrot.slane %v1033, %v1454
        %v1456 = vsel %vm1113, %v1455, %v1451
        %v1457 = vlaneseq
        %v1458 = vshrl.u32 %v1457, 7
        %v1459 = vsub.s32 %v1115, %v1458
        %v1460 = vrot.slane %v1034, %v1459
        %v1461 = vsel %vm1120, %v1460, %v1456
        %v1462 = vlaneseq
        %v1463 = vshrl.u32 %v1462, 7
        %v1464 = vsub.s32 %v1122, %v1463
        %v1465 = vrot.slane %v1035, %v1464
        %v1466 = vsel %vm1127, %v1465, %v1461
        %v1467 = vlaneseq
        %v1468 = vshrl.u32 %v1467, 7
        %v1469 = vsub.s32 %v1129, %v1468
        %v1470 = vrot.slane %v1036, %v1469
        %v1471 = vsel %vm1134, %v1470, %v1466
        %v1472 = vlaneseq
        %v1473 = vshrl.u32 %v1472, 7
        %v1474 = vsub.s32 %v1136, %v1473
        %v1475 = vrot.slane %v1037, %v1474
        %v1476 = vsel %vm1141, %v1475, %v1471
        %v1477 = vlaneseq
        %v1478 = vshrl.u32 %v1477, 7
        %v1479 = vsub.s32 %v1143, %v1478
        %v1480 = vrot.slane %v1038, %v1479
        %v1481 = vsel %vm1148, %v1480, %v1476
        %v1482 = vlaneseq
        %v1483 = vshrl.u32 %v1482, 7
        %v1484 = vsub.s32 %v1150, %v1483
        %v1485 = vrot.slane %v1039, %v1484
        %v1486 = vsel %vm1155, %v1485, %v1481
        %v1487 = vlaneseq
        %v1488 = vshrl.u32 %v1487, 7
        %v1489 = vsub.s32 %v1157, %v1488
        %v1490 = vrot.slane %v1040, %v1489
        %v1491 = vsel %vm1162, %v1490, %v1486
        %v1492 = vlaneseq
        %v1493 = vshrl.u32 %v1492, 7
        %v1494 = vsub.s32 %v1164, %v1493
        %v1495 = vrot.slane %v1041, %v1494
        %v1496 = vsel %vm1169, %v1495, %v1491
        %v1497 = vlaneseq
        %v1498 = vshrl.u32 %v1497, 7
        %v1499 = vsub.s32 %v1171, %v1498
        %v1500 = vrot.slane %v1042, %v1499
        %v1501 = vsel %vm1176, %v1500, %v1496
        %v1502 = vlaneseq
        %v1503 = vshrl.u32 %v1502, 7
        %v1504 = vsub.s32 %v1178, %v1503
        %v1505 = vrot.slane %v1043, %v1504
        %v1506 = vsel %vm1183, %v1505, %v1501
        %v1507 = vlaneseq
        %v1508 = vshrl.u32 %v1507, 7
        %v1509 = vsub.s32 %v1185, %v1508
        %v1510 = vrot.slane %v1044, %v1509
        %v1511 = vsel %vm1190, %v1510, %v1506
        %v1512 = vlaneseq
        %v1513 = vshrl.u32 %v1512, 7
        %v1514 = vsub.s32 %v1192, %v1513
        %v1515 = vrot.slane %v1045, %v1514
        %v1516 = vsel %vm1197, %v1515, %v1511
        %v1517 = vlaneseq
        %v1518 = vshrl.u32 %v1517, 7
        %v1519 = vsub.s32 %v1199, %v1518
        %v1520 = vrot.slane %v1046, %v1519
        %v1521 = vsel %vm1204, %v1520, %v1516
        %v1522 = vlaneseq
        %v1523 = vshrl.u32 %v1522, 7
        %v1524 = vsub.s32 %v1096, %v1523
        %v1525 = vrot.slane %v1047, %v1524
        %v1526 = vlaneseq
        %v1527 = vshrl.u32 %v1526, 7
        %v1528 = vsub.s32 %v1101, %v1527
        %v1529 = vrot.slane %v1048, %v1528
        %v1530 = vsel %vm1106, %v1529, %v1525
        %v1531 = vlaneseq
        %v1532 = vshrl.u32 %v1531, 7
        %v1533 = vsub.s32 %v1108, %v1532
        %v1534 = vrot.slane %v1049, %v1533
        %v1535 = vsel %vm1113, %v1534, %v1530
        %v1536 = vlaneseq
        %v1537 = vshrl.u32 %v1536, 7
        %v1538 = vsub.s32 %v1115, %v1537
        %v1539 = vrot.slane %v1050, %v1538
        %v1540 = vsel %vm1120, %v1539, %v1535
        %v1541 = vlaneseq
        %v1542 = vshrl.u32 %v1541, 7
        %v1543 = vsub.s32 %v1122, %v1542
        %v1544 = vrot.slane %v1051, %v1543
        %v1545 = vsel %vm1127, %v1544, %v1540
        %v1546 = vlaneseq
        %v1547 = vshrl.u32 %v1546, 7
        %v1548 = vsub.s32 %v1129, %v1547
        %v1549 = vrot.slane %v1052, %v1548
        %v1550 = vsel %vm1134, %v1549, %v1545
        %v1551 = vlaneseq
        %v1552 = vshrl.u32 %v1551, 7
        %v1553 = vsub.s32 %v1136, %v1552
        %v1554 = vrot.slane %v1053, %v1553
        %v1555 = vsel %vm1141, %v1554, %v1550
        %v1556 = vlaneseq
        %v1557 = vshrl.u32 %v1556, 7
        %v1558 = vsub.s32 %v1143, %v1557
        %v1559 = vrot.slane %v1054, %v1558
        %v1560 = vsel %vm1148, %v1559, %v1555
        %v1561 = vlaneseq
        %v1562 = vshrl.u32 %v1561, 7
        %v1563 = vsub.s32 %v1150, %v1562
        %v1564 = vrot.slane %v1055, %v1563
        %v1565 = vsel %vm1155, %v1564, %v1560
        %v1566 = vlaneseq
        %v1567 = vshrl.u32 %v1566, 7
        %v1568 = vsub.s32 %v1157, %v1567
        %v1569 = vrot.slane %v1056, %v1568
        %v1570 = vsel %vm1162, %v1569, %v1565
        %v1571 = vlaneseq
        %v1572 = vshrl.u32 %v1571, 7
        %v1573 = vsub.s32 %v1164, %v1572
        %v1574 = vrot.slane %v1057, %v1573
        %v1575 = vsel %vm1169, %v1574, %v1570
        %v1576 = vlaneseq
        %v1577 = vshrl.u32 %v1576, 7
        %v1578 = vsub.s32 %v1171, %v1577
        %v1579 = vrot.slane %v1058, %v1578
        %v1580 = vsel %vm1176, %v1579, %v1575
        %v1581 = vlaneseq
        %v1582 = vshrl.u32 %v1581, 7
        %v1583 = vsub.s32 %v1178, %v1582
        %v1584 = vrot.slane %v1059, %v1583
        %v1585 = vsel %vm1183, %v1584, %v1580
        %v1586 = vlaneseq
        %v1587 = vshrl.u32 %v1586, 7
        %v1588 = vsub.s32 %v1185, %v1587
        %v1589 = vrot.slane %v1060, %v1588
        %v1590 = vsel %vm1190, %v1589, %v1585
        %v1591 = vlaneseq
        %v1592 = vshrl.u32 %v1591, 7
        %v1593 = vsub.s32 %v1192, %v1592
        %v1594 = vrot.slane %v1061, %v1593
        %v1595 = vsel %vm1197, %v1594, %v1590
        %v1596 = vlaneseq
        %v1597 = vshrl.u32 %v1596, 7
        %v1598 = vsub.s32 %v1199, %v1597
        %v1599 = vrot.slane %v1062, %v1598
        %v1600 = vsel %vm1204, %v1599, %v1595
        %v1601 = vlaneseq
        %v1602 = vshrl.u32 %v1601, 7
        %v1603 = vsub.s32 %v1096, %v1602
        %v1604 = vrot.slane %v1063, %v1603
        %v1605 = vlaneseq
        %v1606 = vshrl.u32 %v1605, 7
        %v1607 = vsub.s32 %v1101, %v1606
        %v1608 = vrot.slane %v1064, %v1607
        %v1609 = vsel %vm1106, %v1608, %v1604
        %v1610 = vlaneseq
        %v1611 = vshrl.u32 %v1610, 7
        %v1612 = vsub.s32 %v1108, %v1611
        %v1613 = vrot.slane %v1065, %v1612
        %v1614 = vsel %vm1113, %v1613, %v1609
        %v1615 = vlaneseq
        %v1616 = vshrl.u32 %v1615, 7
        %v1617 = vsub.s32 %v1115, %v1616
        %v1618 = vrot.slane %v1066, %v1617
        %v1619 = vsel %vm1120, %v1618, %v1614
        %v1620 = vlaneseq
        %v1621 = vshrl.u32 %v1620, 7
        %v1622 = vsub.s32 %v1122, %v1621
        %v1623 = vrot.slane %v1067, %v1622
        %v1624 = vsel %vm1127, %v1623, %v1619
        %v1625 = vlaneseq
        %v1626 = vshrl.u32 %v1625, 7
        %v1627 = vsub.s32 %v1129, %v1626
        %v1628 = vrot.slane %v1068, %v1627
        %v1629 = vsel %vm1134, %v1628, %v1624
        %v1630 = vlaneseq
        %v1631 = vshrl.u32 %v1630, 7
        %v1632 = vsub.s32 %v1136, %v1631
        %v1633 = vrot.slane %v1069, %v1632
        %v1634 = vsel %vm1141, %v1633, %v1629
        %v1635 = vlaneseq
        %v1636 = vshrl.u32 %v1635, 7
        %v1637 = vsub.s32 %v1143, %v1636
        %v1638 = vrot.slane %v1070, %v1637
        %v1639 = vsel %vm1148, %v1638, %v1634
        %v1640 = vlaneseq
        %v1641 = vshrl.u32 %v1640, 7
        %v1642 = vsub.s32 %v1150, %v1641
        %v1643 = vrot.slane %v1071, %v1642
        %v1644 = vsel %vm1155, %v1643, %v1639
        %v1645 = vlaneseq
        %v1646 = vshrl.u32 %v1645, 7
        %v1647 = vsub.s32 %v1157, %v1646
        %v1648 = vrot.slane %v1072, %v1647
        %v1649 = vsel %vm1162, %v1648, %v1644
        %v1650 = vlaneseq
        %v1651 = vshrl.u32 %v1650, 7
        %v1652 = vsub.s32 %v1164, %v1651
        %v1653 = vrot.slane %v1073, %v1652
        %v1654 = vsel %vm1169, %v1653, %v1649
        %v1655 = vlaneseq
        %v1656 = vshrl.u32 %v1655, 7
        %v1657 = vsub.s32 %v1171, %v1656
        %v1658 = vrot.slane %v1074, %v1657
        %v1659 = vsel %vm1176, %v1658, %v1654
        %v1660 = vlaneseq
        %v1661 = vshrl.u32 %v1660, 7
        %v1662 = vsub.s32 %v1178, %v1661
        %v1663 = vrot.slane %v1075, %v1662
        %v1664 = vsel %vm1183, %v1663, %v1659
        %v1665 = vlaneseq
        %v1666 = vshrl.u32 %v1665, 7
        %v1667 = vsub.s32 %v1185, %v1666
        %v1668 = vrot.slane %v1076, %v1667
        %v1669 = vsel %vm1190, %v1668, %v1664
        %v1670 = vlaneseq
        %v1671 = vshrl.u32 %v1670, 7
        %v1672 = vsub.s32 %v1192, %v1671
        %v1673 = vrot.slane %v1077, %v1672
        %v1674 = vsel %vm1197, %v1673, %v1669
        %v1675 = vlaneseq
        %v1676 = vshrl.u32 %v1675, 7
        %v1677 = vsub.s32 %v1199, %v1676
        %v1678 = vrot.slane %v1078, %v1677
        %v1679 = vsel %vm1204, %v1678, %v1674
        %v1680 = vlaneseq
        %v1681 = vshrl.u32 %v1680, 7
        %v1682 = vsub.s32 %v1096, %v1681
        %v1683 = vrot.slane %v1079, %v1682
        %v1684 = vlaneseq
        %v1685 = vshrl.u32 %v1684, 7
        %v1686 = vsub.s32 %v1101, %v1685
        %v1687 = vrot.slane %v1080, %v1686
        %v1688 = vsel %vm1106, %v1687, %v1683
        %v1689 = vlaneseq
        %v1690 = vshrl.u32 %v1689, 7
        %v1691 = vsub.s32 %v1108, %v1690
        %v1692 = vrot.slane %v1081, %v1691
        %v1693 = vsel %vm1113, %v1692, %v1688
        %v1694 = vlaneseq
        %v1695 = vshrl.u32 %v1694, 7
        %v1696 = vsub.s32 %v1115, %v1695
        %v1697 = vrot.slane %v1082, %v1696
        %v1698 = vsel %vm1120, %v1697, %v1693
        %v1699 = vlaneseq
        %v1700 = vshrl.u32 %v1699, 7
        %v1701 = vsub.s32 %v1122, %v1700
        %v1702 = vrot.slane %v1083, %v1701
        %v1703 = vsel %vm1127, %v1702, %v1698
        %v1704 = vlaneseq
        %v1705 = vshrl.u32 %v1704, 7
        %v1706 = vsub.s32 %v1129, %v1705
        %v1707 = vrot.slane %v1084, %v1706
        %v1708 = vsel %vm1134, %v1707, %v1703
        %v1709 = vlaneseq
        %v1710 = vshrl.u32 %v1709, 7
        %v1711 = vsub.s32 %v1136, %v1710
        %v1712 = vrot.slane %v1085, %v1711
        %v1713 = vsel %vm1141, %v1712, %v1708
        %v1714 = vlaneseq
        %v1715 = vshrl.u32 %v1714, 7
        %v1716 = vsub.s32 %v1143, %v1715
        %v1717 = vrot.slane %v1086, %v1716
        %v1718 = vsel %vm1148, %v1717, %v1713
        %v1719 = vlaneseq
        %v1720 = vshrl.u32 %v1719, 7
        %v1721 = vsub.s32 %v1150, %v1720
        %v1722 = vrot.slane %v1087, %v1721
        %v1723 = vsel %vm1155, %v1722, %v1718
        %v1724 = vlaneseq
        %v1725 = vshrl.u32 %v1724, 7
        %v1726 = vsub.s32 %v1157, %v1725
        %v1727 = vrot.slane %v1088, %v1726
        %v1728 = vsel %vm1162, %v1727, %v1723
        %v1729 = vlaneseq
        %v1730 = vshrl.u32 %v1729, 7
        %v1731 = vsub.s32 %v1164, %v1730
        %v1732 = vrot.slane %v1089, %v1731
        %v1733 = vsel %vm1169, %v1732, %v1728
        %v1734 = vlaneseq
        %v1735 = vshrl.u32 %v1734, 7
        %v1736 = vsub.s32 %v1171, %v1735
        %v1737 = vrot.slane %v1090, %v1736
        %v1738 = vsel %vm1176, %v1737, %v1733
        %v1739 = vlaneseq
        %v1740 = vshrl.u32 %v1739, 7
        %v1741 = vsub.s32 %v1178, %v1740
        %v1742 = vrot.slane %v1091, %v1741
        %v1743 = vsel %vm1183, %v1742, %v1738
        %v1744 = vlaneseq
        %v1745 = vshrl.u32 %v1744, 7
        %v1746 = vsub.s32 %v1185, %v1745
        %v1747 = vrot.slane %v1092, %v1746
        %v1748 = vsel %vm1190, %v1747, %v1743
        %v1749 = vlaneseq
        %v1750 = vshrl.u32 %v1749, 7
        %v1751 = vsub.s32 %v1192, %v1750
        %v1752 = vrot.slane %v1093, %v1751
        %v1753 = vsel %vm1197, %v1752, %v1748
        %v1754 = vlaneseq
        %v1755 = vshrl.u32 %v1754, 7
        %v1756 = vsub.s32 %v1199, %v1755
        %v1757 = vrot.slane %v1094, %v1756
        %v1758 = vsel %vm1204, %v1757, %v1753
        %vm1759 = vcmask 1041409
        %v1760 = vsel %vm1759, %v1284, %v1205
        %vm1761 = vcmask 1042434
        %v1762 = vsel %vm1761, %v1363, %v1760
        %vm1763 = vcmask 1043459
        %v1764 = vsel %vm1763, %v1442, %v1762
        %vm1765 = vcmask 1044484
        %v1766 = vsel %vm1765, %v1521, %v1764
        %vm1767 = vcmask 1045509
        %v1768 = vsel %vm1767, %v1600, %v1766
        %vm1769 = vcmask 1046534
        %v1770 = vsel %vm1769, %v1679, %v1768
        %vm1771 = vcmask 1047559
        %v1772 = vsel %vm1771, %v1758, %v1770
        %v1773 = vpack.c.b16 %v1772, %v1772
        %v1791 = vunpack.c.l.b16 %v880
        %v1792 = vunpack.c.l.b16 %v881
        %v1793 = vunpack.c.l.b16 %v882
        %v1794 = vunpack.c.l.b16 %v883
        %v1795 = vunpack.c.l.b16 %v884
        %v1796 = vunpack.c.l.b16 %v885
        %v1797 = vunpack.c.l.b16 %v886
        %v1798 = vunpack.c.l.b16 %v887
        %v1799 = vunpack.c.l.b16 %v888
        %v1800 = vunpack.c.l.b16 %v889
        %v1801 = vunpack.c.l.b16 %v890
        %v1802 = vunpack.c.l.b16 %v891
        %v1803 = vunpack.c.l.b16 %v892
        %v1804 = vunpack.c.l.b16 %v893
        %v1805 = vunpack.c.l.b16 %v894
        %v1806 = vunpack.c.l.b16 %v895
        %v1807 = vpack.c.b16 %v1792, %v1791
        %v1808 = vpack.c.b16 %v1794, %v1793
        %v1809 = vpack.c.b16 %v1796, %v1795
        %v1810 = vpack.c.b16 %v1798, %v1797
        %v1811 = vpack.c.b16 %v1800, %v1799
        %v1812 = vpack.c.b16 %v1802, %v1801
        %v1813 = vpack.c.b16 %v1804, %v1803
        %v1814 = vpack.c.b16 %v1806, %v1805
        %1823 = vmatprep.subr.bf16.mxu0 0
        %1824 = vmatpush1.bf16.msra.mxu0 %v1807
        %1825 = vmatprep.subr.bf16.mxu0 0
        %1826 = vmatpush1.bf16.msra.mxu0 %v1808
        %1827 = vmatprep.subr.bf16.mxu0 0
        %1828 = vmatpush1.bf16.msra.mxu0 %v1809
        %1829 = vmatprep.subr.bf16.mxu0 0
        %1830 = vmatpush1.bf16.msra.mxu0 %v1810
        %1831 = vmatprep.subr.bf16.mxu0 0
        %1832 = vmatpush1.bf16.msra.mxu0 %v1811
        %1833 = vmatprep.subr.bf16.mxu0 0
        %1834 = vmatpush1.bf16.msra.mxu0 %v1812
        %1835 = vmatprep.subr.bf16.mxu0 0
        %1836 = vmatpush1.bf16.msra.mxu0 %v1813
        %1837 = vmatprep.subr.bf16.mxu0 0
        %1838 = vmatpush1.bf16.msra.mxu0 %v1814
        %1839 = vmatprep.subr.bf16.mxu0 0
        %1840 = vmatpush1.bf16.msra.mxu0 0
        %1841 = vmatprep.subr.bf16.mxu0 0
        %1842 = vmatpush1.bf16.msra.mxu0 0
        %1843 = vmatprep.subr.bf16.mxu0 0
        %1844 = vmatpush1.bf16.msra.mxu0 0
        %1845 = vmatprep.subr.bf16.mxu0 0
        %1846 = vmatpush1.bf16.msra.mxu0 0
        %1847 = vmatprep.subr.bf16.mxu0 0
        %1848 = vmatpush1.bf16.msra.mxu0 0
        %1849 = vmatprep.subr.bf16.mxu0 0
        %1850 = vmatpush1.bf16.msra.mxu0 0
        %1851 = vmatprep.subr.bf16.mxu0 0
        %1852 = vmatpush1.bf16.msra.mxu0 0
        %1853 = vmatprep.subr.bf16.mxu0 0
        %1854 = vmatpush1.bf16.msra.mxu0 0
        %1855 = vmatprep.mubr.bf16.mxu0 0
        %1856 = vmatmul.mubr.bf16.gmra.mrb[0].mxu0 %v1773
        %v1857 = vpop.f32.mrb[0].mxu0
        %v1858 = vadd.f32 %v901, %v1857
        %v1859 = vpop.f32.mrb[0].mxu0
        %v1860 = vpop.f32.mrb[0].mxu0
        %v1861 = vpop.f32.mrb[0].mxu0
        %1862 = vdwg.mxu0
        %vm1863 = vcmask 261120
        %1864 = vst.msk [vmem:[%s166] sm:$0xff] %vm1863, %v1858
        %s1865 = sand.u32 %s93, 1
        %s1866 = scalar_lea.sflag [#allocation3], %s1865
        %s1867 = sand.u32 %s93, 1
        %s1868 = smul.addr %s1867, 8
        %s1869 = scalar_lea.vmem [#allocation2], %s1868
        // Predicated region
        $region33: #{tpu_custom_call.1} parent=31 // pred_check
          %p1870 = pneg %p103
        $region34: #{tpu_custom_call.1} parent=31 // pred_check_branch
          %1872 = sbr.rel (%p1870) target = $region36
        $region35: #{tpu_custom_call.1} parent=31 // pred_region
          %s1874 = ssub.s32 128, 128
          %1875 = vsyncadd %s1866, %s1874
          %s1876 = smul.addr %s17, 128
          %s1877 = scalar_lea.hbm %s3, %s1876
          %s1879 = sshll.u32 %s1869, 4
          %s1880 = int_to_ptr.vmem [resolvable:$true] %s1879
          %1882 = dma.vmem_to_hbm [thread:$0]  %s1880, 128, %s1877, %s1866
        $region36: #{tpu_custom_call.1} parent=31 // pred_fallthru
          _
      $region32: #{tpu_custom_call.1} parent=5 // pred_fallthru
        _
      %p1883 = scmp.le.s32.totalorder 2, %s12
      // Predicated region
      $region37: #{tpu_custom_call.1} parent=5 // pred_check
        %p1884 = pneg %p1883
      $region38: #{tpu_custom_call.1} parent=5 // pred_check_branch
        %1886 = sbr.rel (%p1884) target = $region40
      $region39: #{tpu_custom_call.1} parent=5 // pred_region
        %s1887 = ssub.s32 %s12, 2
        // Predicated region
        $region41: #{tpu_custom_call.1} parent=39 // pred_check
          %p1888 = pneg %p109
        $region42: #{tpu_custom_call.1} parent=39 // pred_check_branch
          %1890 = sbr.rel (%p1888) target = $region44
        $region43: #{tpu_custom_call.1} parent=39 // pred_region
          %s1891 = sand.u32 %s94, 1
          %s1892 = scalar_lea.sflag [#allocation3], %s1891
          %s1893 = sand.u32 %s94, 1
          %s1894 = smul.addr %s1893, 8
          %s1895 = scalar_lea.vmem [#allocation2], %s1894
          %1896 = dma.done %s1892, 128
        $region44: #{tpu_custom_call.1} parent=39 // pred_fallthru
          _
      $region40: #{tpu_custom_call.1} parent=5 // pred_fallthru
        _
    $region6: #{tpu_custom_call.1} parent=1 // loop_footer
      %s16 = sadd.s32 1, %s12
    $region7: #{tpu_custom_call.1} parent=1 // loop_footer_branch
      %11 = sbr.rel target = $region3
    $region8: #{tpu_custom_call.1} parent=1 // loop_exit
      _
    %1897 = vsyncpa [#allocation3], 1
    %s1898 = scalar_lea.sflag [#allocation3], 1
    %1899 = vsyncpa %s1898, 1

</llo_original>
